<compile_context>
chip_gen: v7x
topology: tpu7x:2x2x1
jax: 0.10.0
libtpu: 0.0.40
codegen_flags: <defaults>
</compile_context>

<pallas_src>
import functools

import jax
import jax.numpy as jnp
import numpy as np
from jax.experimental import pallas as pl
from jax.experimental.pallas import tpu as pltpu

GN_EPS = 1e-5      # PyTorch GroupNorm default eps
LOG_EPS = 1e-8     # Encoder.eps
LANE = 128


def _round_up(n, m):
    return ((n + m - 1) // m) * m


# --------------------------------------------------------------------------
# Feature extraction (complex glue, plain JAX) — matches the torch code
# (real 1e-6 added to the complex denominator, magnitude-normalized phase).
# --------------------------------------------------------------------------
def extract_features(x):
    """x: complex64 [B, T, F, M] -> float32 [B, T, (2M-1)*F]"""
    x0 = x[..., 0]
    pwrx = jnp.abs(x0) ** 2
    logx = jnp.log(pwrx + LOG_EPS)
    ph = x[..., 1:] / (x0[..., None] + 1e-6)
    ph = ph / (jnp.abs(ph) + 1e-6)
    B, T, F, Mm1 = ph.shape
    ph = ph.reshape(B, T, F * Mm1)
    feat = jnp.concatenate([logx, jnp.real(ph), jnp.imag(ph)], axis=-1)
    return feat.astype(jnp.float32)


# --------------------------------------------------------------------------
# Pallas kernel: cnv1 -> streamed DepSepConv1d layers -> cnv2
# --------------------------------------------------------------------------
def encoder_kernel(dil_ref,                      # SMEM [NL] int32 (scalar prefetch)
                   feat_ref,                     # [Bb, T, Cin]  bf16
                   w1_ref, b1_ref,               # [Cin, N1p] bf16, [1, N1p] f32
                   pw1_w_ref, pw1_b_ref,         # [1, N1p, N2p] bf16, [1, 1, N2p] f32
                   a1_ref, gn1_w_ref, gn1_b_ref,  # [1, 1, N2p] f32
                   dw_w_ref, dw_b_ref,           # [1, ksize, N2p] f32, [1, 1, N2p] f32
                   a2_ref, gn2_w_ref, gn2_b_ref,  # [1, 1, N2p] f32
                   pw2_w_ref, pw2_b_ref,         # [1, N2p, N1p] bf16, [1, 1, N1p] f32
                   w2_ref, b2_ref,               # [N1p, Cout_p] bf16, [1, Cout_p] f32
                   out_ref,                      # [Bb, T, Cout_p] bf16
                   h_ref,                        # scratch [Bb*T, N1p] f32 (layer carry)
                   zp_ref,                       # scratch [Bb, Tpad, N2p] f32 (dw halo)
                   *, ksize, pad_lo):
    l = pl.program_id(1)
    n_layers = pl.num_programs(1)
    Bb, T, Cin = feat_ref.shape
    N2p = zp_ref.shape[2]
    maxpad = zp_ref.shape[1] - pad_lo - T
    ctr = (ksize - 1) // 2

    # ---- cnv1: 1x1 conv == one MXU matmul, once per batch block ----------
    @pl.when(l == 0)
    def _():
        feat2d = feat_ref[...].reshape(Bb * T, Cin)
        h0 = jnp.dot(feat2d, w1_ref[...], preferred_element_type=jnp.float32)
        h_ref[...] = h0 + b1_ref[...]

    h = h_ref[...]                                            # [Bb*T, N1p] f32

    # ---- DepSepConv1d layer `l` (ResSequential: h = h + seq(h)) ----------
    # pointwise Conv1d(N1 -> N2) + PReLU
    z = jnp.dot(h.astype(jnp.bfloat16), pw1_w_ref[0],
                preferred_element_type=jnp.float32) + pw1_b_ref[0]
    a1 = a1_ref[0]
    z = jnp.where(z >= 0, z, a1 * z)
    z3 = z.reshape(Bb, T, N2p)

    # GroupNorm(C, C) statistics (two-pass, centered variance, f32).
    m1 = jnp.mean(z3, axis=1, keepdims=True)                  # [Bb, 1, N2p]
    zc = z3 - m1
    var1 = jnp.mean(zc * zc, axis=1, keepdims=True)
    gamma1 = gn1_w_ref[0]                                     # [1, N2p]
    beta1 = gn1_b_ref[0]
    scale1 = gamma1 * jax.lax.rsqrt(var1 + GN_EPS)            # [Bb, 1, N2p]

    # GN1 affine folded into the depthwise conv:
    #   valid tap:   (dw*scale)*zc + dw*beta == dw * GN(z)
    #   halo tap:    (dw*scale)*(-beta/scale) + dw*beta == 0  (== zero padding)
    # NOTE: correctness of padded lanes relies on all per-channel params
    # being zero-padded; padded channels stay exactly 0 end-to-end.
    zp_ref[:, pad_lo:pad_lo + T, :] = zc
    safe1 = jnp.where(scale1 == 0.0, 1.0, scale1)
    halo = -beta1 / safe1                                     # [Bb, 1, N2p]
    if pad_lo > 0:
        zp_ref[:, :pad_lo, :] = jnp.broadcast_to(halo, (Bb, pad_lo, N2p))
    if maxpad > 0:
        zp_ref[:, pad_lo + T:, :] = jnp.broadcast_to(halo, (Bb, maxpad, N2p))

    # depthwise dilated Conv1d(N2 -> N2, groups=N2), 'same' length.
    dil = dil_ref[l]                                          # runtime dilation
    dw = dw_w_ref[0]                                          # [ksize, N2p] f32
    acc = None
    dw_sum = None
    for k in range(ksize):                                    # static tap unroll
        start = pad_lo + (k - ctr) * dil
        tap = zp_ref[:, pl.ds(start, T), :]                   # [Bb, T, N2p]
        wk = dw[k][None, :] * scale1                          # [Bb, 1, N2p]
        acc = tap * wk if acc is None else acc + tap * wk
        dw_sum = dw[k] if dw_sum is None else dw_sum + dw[k]
    y3 = acc + (beta1 * dw_sum + dw_b_ref[0])                 # [Bb, T, N2p]

    # PReLU + GroupNorm(C, C)
    a2 = a2_ref[0]
    y3 = jnp.where(y3 >= 0, y3, a2 * y3)
    m2 = jnp.mean(y3, axis=1, keepdims=True)
    yc = y3 - m2
    var2 = jnp.mean(yc * yc, axis=1, keepdims=True)
    scale2 = gn2_w_ref[0] * jax.lax.rsqrt(var2 + GN_EPS)
    y3 = yc * scale2 + gn2_b_ref[0]
    # Dropout(p=0.0) is the identity.

    # pointwise Conv1d(N2 -> N1) + residual
    y2d = y3.reshape(Bb * T, N2p).astype(jnp.bfloat16)
    h_new = h + jnp.dot(y2d, pw2_w_ref[0],
                        preferred_element_type=jnp.float32) + pw2_b_ref[0]
    h_ref[...] = h_new

    # ---- cnv2: only the K*D channels surviving torch's `h[0]` selection --
    @pl.when(l == n_layers - 1)
    def _():
        out = jnp.dot(h_new.astype(jnp.bfloat16), w2_ref[...],
                      preferred_element_type=jnp.float32) + b2_ref[...]
        out_ref[...] = out.reshape(Bb, T, out_ref.shape[2]).astype(out_ref.dtype)


def _const_spec(shape):
    return pl.BlockSpec(shape, lambda b, l, d, _n=len(shape): (0,) * _n)


def _layer_spec(shape):
    # Blocks the leading (layer) axis; trailing dims are full-extent.
    return pl.BlockSpec((1,) + tuple(shape[1:]),
                        lambda b, l, d, _n=len(shape) - 1: (l,) + (0,) * _n)


def _vmem_limit_bytes():
    cap = 64 * 1024 * 1024
    try:
        info = pltpu.get_tpu_info()
        cap = int(getattr(info, "vmem_capacity_bytes", cap))
    except Exception:
        pass
    # Leave generous headroom below the physical per-core capacity
    # (v7x: 64 MiB -> ~48 MiB; v5e/v6e: 128 MiB -> capped at 100 MiB).
    return int(min(max(cap - 16 * 1024 * 1024, 32 * 1024 * 1024),
                   100 * 1024 * 1024))


def encoder_forward(x, params, *, K, D, dilations, ksize, batch_block=8):
    """x: complex64 [B, T, F, M] -> float32 [B, D, T, K]"""
    assert ksize % 2 == 1, "depthwise 'same' padding assumes odd ksize"
    assert len(dilations) >= 1

    feat = extract_features(x)                          # [B, T, Cin] f32
    B, T, Cin = feat.shape
    N1 = params["w1"].shape[1]
    N2 = params["pw1_w"].shape[2]
    NL = params["pw1_w"].shape[0]
    KD = K * D

    N1p, N2p, Cout_p = (_round_up(c, LANE) for c in (N1, N2, KD))

    # torch: cnv2 output reshaped (B, K, 2, D, T), permuted, then h[0] taken.
    # Channel (k, s, d) -> k*2D + s*D + d; only s == 0 survives.
    keep = (np.arange(K)[:, None] * (2 * D) + np.arange(D)[None, :]).reshape(-1)

    bf16, f32 = jnp.bfloat16, jnp.float32

    def pad_to(a, shape, dtype):
        a = jnp.pad(a, [(0, s - d) for d, s in zip(a.shape, shape)])
        return a.astype(dtype)

    def vec(a, cp):                                     # [NL, C] -> [NL, 1, Cp]
        return pad_to(a[:, None, :], (a.shape[0], 1, cp), f32)

    weights = (
        pad_to(params["w1"], (Cin, N1p), bf16),          # Cin NOT padded
        pad_to(params["b1"][None, :], (1, N1p), f32),
        pad_to(params["pw1_w"], (NL, N1p, N2p), bf16),
        vec(params["pw1_b"], N2p),
        vec(params["a1"], N2p),
        vec(params["gn1_w"], N2p),
        vec(params["gn1_b"], N2p),
        pad_to(params["dw_w"], (NL, ksize, N2p), f32),
        vec(params["dw_b"], N2p),
        vec(params["a2"], N2p),
        vec(params["gn2_w"], N2p),
        vec(params["gn2_b"], N2p),
        pad_to(params["pw2_w"], (NL, N2p, N1p), bf16),
        vec(params["pw2_b"], N1p),
        pad_to(params["w2"][:, keep], (N1p, Cout_p), bf16),
        pad_to(params["b2"][keep][None, :], (1, Cout_p), f32),
    )

    # Batch block: keep the batch grid >= 2 steps so both v7x TCs are fed and
    # the pipeline has something to overlap; channels of feat are NOT padded.
    Bb = max(1, min(batch_block, (B + 1) // 2))
    B_p = _round_up(B, Bb)
    feat = jnp.pad(feat, ((0, B_p - B), (0, 0), (0, 0))).astype(bf16)

    maxpad = (ksize - 1) // 2 * max(dilations)
    pad_lo = _round_up(maxpad, 8) if maxpad else 0       # 8-aligned interior store
    Tpad = pad_lo + T + maxpad

    dil_arr = jnp.asarray(dilations, dtype=jnp.int32)    # scalar-prefetch schedule

    kernel = functools.partial(encoder_kernel, ksize=ksize, pad_lo=pad_lo)

    in_specs = [
        pl.BlockSpec((Bb, T, Cin), lambda b, l, d: (b, 0, 0)),   # feat
        _const_spec((Cin, N1p)),        # w1
        _const_spec((1, N1p)),          # b1
        _layer_spec((NL, N1p, N2p)),    # pw1_w
        _layer_spec((NL, 1, N2p)),      # pw1_b
        _layer_spec((NL, 1, N2p)),      # a1
        _layer_spec((NL, 1, N2p)),      # gn1_w
        _layer_spec((NL, 1, N2p)),      # gn1_b
        _layer_spec((NL, ksize, N2p)),  # dw_w
        _layer_spec((NL, 1, N2p)),      # dw_b
        _layer_spec((NL, 1, N2p)),      # a2
        _layer_spec((NL, 1, N2p)),      # gn2_w
        _layer_spec((NL, 1, N2p)),      # gn2_b
        _layer_spec((NL, N2p, N1p)),    # pw2_w
        _layer_spec((NL, 1, N1p)),      # pw2_b
        _const_spec((N1p, Cout_p)),     # w2
        _const_spec((1, Cout_p)),       # b2
    ]

    out = pl.pallas_call(
        kernel,
        out_shape=jax.ShapeDtypeStruct((B_p, T, Cout_p), bf16),
        grid_spec=pltpu.PrefetchScalarGridSpec(
            num_scalar_prefetch=1,
            grid=(B_p // Bb, NL),
            in_specs=in_specs,
            out_specs=pl.BlockSpec((Bb, T, Cout_p), lambda b, l, d: (b, 0, 0)),
            scratch_shapes=[pltpu.VMEM((Bb * T, N1p), f32),
                            pltpu.VMEM((Bb, Tpad, N2p), f32)]),
        compiler_params=pltpu.CompilerParams(
            dimension_semantics=("parallel", "arbitrary"),
            vmem_limit_bytes=_vmem_limit_bytes()),
    )(dil_arr, feat, *weights)                           # [B_p, T, Cout_p] bf16

    out = out[:B, :, :KD].astype(jnp.float32).reshape(B, T, K, D)
    return out.transpose(0, 3, 1, 2)                     # [B, D, T, K]


# --------------------------------------------------------------------------
# Pure-JAX reference (bf16 matmul operands to mirror kernel numerics)
# --------------------------------------------------------------------------
def _mm(a, w):
    return jnp.einsum("btc,cd->btd", a.astype(jnp.bfloat16),
                      w.astype(jnp.bfloat16),
                      preferred_element_type=jnp.float32)


def encoder_ref(feat, params, *, dilations, ksize):
    h = _mm(feat, params["w1"]) + params["b1"]
    T = feat.shape[1]
    for l, dil in enumerate(dilations):
        res = h
        z = _mm(h, params["pw1_w"][l]) + params["pw1_b"][l]
        z = jnp.where(z >= 0, z, params["a1"][l] * z)
        m = z.mean(axis=1, keepdims=True)
        v = ((z - m) ** 2).mean(axis=1, keepdims=True)
        z = (z - m) / jnp.sqrt(v + GN_EPS) * params["gn1_w"][l] + params["gn1_b"][l]

        pad = (ksize - 1) // 2 * dil
        zp = jnp.pad(z, ((0, 0), (pad, pad), (0, 0)))
        y = sum(zp[:, k * dil:k * dil + T, :] * params["dw_w"][l][k]
                for k in range(ksize))
        y = y + params["dw_b"][l]
        y = jnp.where(y >= 0, y, params["a2"][l] * y)
        m = y.mean(axis=1, keepdims=True)
        v = ((y - m) ** 2).mean(axis=1, keepdims=True)
        y = (y - m) / jnp.sqrt(v + GN_EPS) * params["gn2_w"][l] + params["gn2_b"][l]

        h = res + _mm(y, params["pw2_w"][l]) + params["pw2_b"][l]
    return _mm(h, params["w2"]) + params["b2"]


# --------------------------------------------------------------------------
# Deterministic parameter init (synthetic; no checkpoint load)
# --------------------------------------------------------------------------
def init_params(key, Cin, N1, N2, NL, ksize, Cout):
    keys = jax.random.split(key, 10)

    def w(k, shape, fan_in):
        return (jax.random.normal(k, shape, jnp.float32) /
                jnp.sqrt(jnp.float32(fan_in)))

    return dict(
        w1=w(keys[0], (Cin, N1), Cin),
        b1=0.01 * jax.random.normal(keys[1], (N1,), jnp.float32),
        pw1_w=w(keys[2], (NL, N1, N2), N1),
        pw1_b=0.01 * jax.random.normal(keys[3], (NL, N2), jnp.float32),
        a1=jnp.full((NL, N2), 0.25, jnp.float32),        # PReLU init
        gn1_w=jnp.ones((NL, N2), jnp.float32),
        gn1_b=jnp.zeros((NL, N2), jnp.float32),
        dw_w=w(keys[4], (NL, ksize, N2), ksize),
        dw_b=0.01 * jax.random.normal(keys[5], (NL, N2), jnp.float32),
        a2=jnp.full((NL, N2), 0.25, jnp.float32),
        gn2_w=jnp.ones((NL, N2), jnp.float32),
        gn2_b=jnp.zeros((NL, N2), jnp.float32),
        pw2_w=w(keys[6], (NL, N2, N1), N2),
        pw2_b=0.01 * jax.random.normal(keys[7], (NL, N1), jnp.float32),
        w2=w(keys[8], (N1, Cout), N1),
        b2=0.01 * jax.random.normal(keys[9], (Cout,), jnp.float32),
    )


if __name__ == "__main__":
    # Small Encoder config (same structure, reduced sizes).
    B, T = 2, 16
    F, K, D, M = 16, 3, 8, 2
    N1, N2 = 32, 64
    L1, L2, ksize = 1, 2, 3
    Cin = (2 * M - 1) * F                  # 48
    Cout = 2 * K * D                       # 48
    NL = L1 * L2
    dilations = [2 ** ll for _ in range(L1) for ll in range(L2)]   # [1, 2]

    key = jax.random.PRNGKey(0)
    kx_re, kx_im, kp = jax.random.split(key, 3)
    x = (jax.random.normal(kx_re, (B, T, F, M), jnp.float32)
         + 1j * jax.random.normal(kx_im, (B, T, F, M), jnp.float32)
         ).astype(jnp.complex64)

    params = init_params(kp, Cin, N1, N2, NL, ksize, Cout)

    out = encoder_forward(x, params, K=K, D=D, dilations=dilations, ksize=ksize)
    out = jax.block_until_ready(out)
    assert out.shape == (B, D, T, K), out.shape

    # Verify kernel against pure-JAX reference (same h[0] slice + transpose).
    feat = extract_features(x)
    ref = encoder_ref(feat, params, dilations=dilations, ksize=ksize)
    ref = ref.reshape(B, T, K, 2, D)[:, :, :, 0, :].transpose(0, 3, 1, 2)
    np.testing.assert_allclose(np.asarray(out), np.asarray(ref),
                               rtol=3e-2, atol=3e-2)

    print("KERNEL_OK")
</pallas_src>

<mosaic_0001>
module attributes {stable_mosaic.version = 11 : i64} {
  func.func @encoder_kernel(%arg0: i32, %arg1: i32, %arg2: memref<2xi32, #tpu.memory_space<smem>>, %arg3: memref<1x16x48xbf16, #tpu.memory_space<vmem>>, %arg4: memref<48x128xbf16, #tpu.memory_space<vmem>>, %arg5: memref<1x128xf32, #tpu.memory_space<vmem>>, %arg6: memref<1x128x128xbf16, #tpu.memory_space<vmem>>, %arg7: memref<1x1x128xf32, #tpu.memory_space<vmem>>, %arg8: memref<1x1x128xf32, #tpu.memory_space<vmem>>, %arg9: memref<1x1x128xf32, #tpu.memory_space<vmem>>, %arg10: memref<1x1x128xf32, #tpu.memory_space<vmem>>, %arg11: memref<1x3x128xf32, #tpu.memory_space<vmem>>, %arg12: memref<1x1x128xf32, #tpu.memory_space<vmem>>, %arg13: memref<1x1x128xf32, #tpu.memory_space<vmem>>, %arg14: memref<1x1x128xf32, #tpu.memory_space<vmem>>, %arg15: memref<1x1x128xf32, #tpu.memory_space<vmem>>, %arg16: memref<1x128x128xbf16, #tpu.memory_space<vmem>>, %arg17: memref<1x1x128xf32, #tpu.memory_space<vmem>>, %arg18: memref<128x128xbf16, #tpu.memory_space<vmem>>, %arg19: memref<1x128xf32, #tpu.memory_space<vmem>>, %arg20: memref<1x16x128xbf16, #tpu.memory_space<vmem>>, %arg21: memref<16x128xf32, #tpu.memory_space<vmem>>, %arg22: memref<1x26x128xf32, #tpu.memory_space<vmem>>) attributes {dimension_semantics = [#tpu.dimension_semantics<parallel>, #tpu.dimension_semantics<arbitrary>], iteration_bounds = array<i64: 2, 2>, scalar_prefetch = 1 : i64, scratch_operands = 2 : i64, tpu.core_type = #tpu.core_type<tc>, window_params = [{transform_indices = @transform_0, window_bounds = array<i64: 1, 16, 48>}, {pipeline_mode = #tpu.pipeline_mode<synchronous>, transform_indices = @transform_1, window_bounds = array<i64: 48, 128>}, {pipeline_mode = #tpu.pipeline_mode<synchronous>, transform_indices = @transform_2, window_bounds = array<i64: 1, 128>}, {transform_indices = @transform_3, window_bounds = array<i64: 1, 128, 128>}, {transform_indices = @transform_4, window_bounds = array<i64: 1, 1, 128>}, {transform_indices = @transform_5, window_bounds = array<i64: 1, 1, 128>}, {transform_indices = @transform_6, window_bounds = array<i64: 1, 1, 128>}, {transform_indices = @transform_7, window_bounds = array<i64: 1, 1, 128>}, {transform_indices = @transform_8, window_bounds = array<i64: 1, 3, 128>}, {transform_indices = @transform_9, window_bounds = array<i64: 1, 1, 128>}, {transform_indices = @transform_10, window_bounds = array<i64: 1, 1, 128>}, {transform_indices = @transform_11, window_bounds = array<i64: 1, 1, 128>}, {transform_indices = @transform_12, window_bounds = array<i64: 1, 1, 128>}, {transform_indices = @transform_13, window_bounds = array<i64: 1, 128, 128>}, {transform_indices = @transform_14, window_bounds = array<i64: 1, 1, 128>}, {pipeline_mode = #tpu.pipeline_mode<synchronous>, transform_indices = @transform_15, window_bounds = array<i64: 128, 128>}, {pipeline_mode = #tpu.pipeline_mode<synchronous>, transform_indices = @transform_16, window_bounds = array<i64: 1, 128>}, {transform_indices = @transform_17, window_bounds = array<i64: 1, 16, 128>}]} {
    %c0_i32 = arith.constant 0 : i32
    %0 = arith.cmpi eq, %arg1, %c0_i32 : i32
    %1 = arith.extui %0 : i1 to i32
    %c0_i32_0 = arith.constant 0 : i32
    %2 = arith.cmpi ne, %1, %c0_i32_0 : i32
    scf.if %2 {
      %c0_74 = arith.constant 0 : index
      %c0_75 = arith.constant 0 : index
      %c0_76 = arith.constant 0 : index
      %157 = vector.load %arg3[%c0_74, %c0_75, %c0_76] : memref<1x16x48xbf16, #tpu.memory_space<vmem>>, vector<1x16x48xbf16>
      %158 = vector.shape_cast %157 : vector<1x16x48xbf16> to vector<16x48xbf16>
      %c0_77 = arith.constant 0 : index
      %c0_78 = arith.constant 0 : index
      %159 = vector.load %arg4[%c0_77, %c0_78] : memref<48x128xbf16, #tpu.memory_space<vmem>>, vector<48x128xbf16>
      %cst_79 = arith.constant dense<0.000000e+00> : vector<16x128xf32>
      %160 = tpu.matmul %158, %159, %cst_79 {dimension_numbers = #tpu.dot_dimension_numbers<[1], [0], [0], [1], [0, 0, 1, 1], [], []>} : vector<16x48xbf16>, vector<48x128xbf16>, vector<16x128xf32> -> vector<16x128xf32>
      %c0_80 = arith.constant 0 : index
      %c0_81 = arith.constant 0 : index
      %161 = vector.load %arg5[%c0_80, %c0_81] : memref<1x128xf32, #tpu.memory_space<vmem>>, vector<1x128xf32>
      %162 = vector.broadcast %161 : vector<1x128xf32> to vector<16x128xf32>
      %163 = arith.addf %160, %162 : vector<16x128xf32>
      %c0_82 = arith.constant 0 : index
      %c0_83 = arith.constant 0 : index
      %164 = vector.load %arg21[%c0_82, %c0_83] : memref<16x128xf32, #tpu.memory_space<vmem>>, vector<16x128xf32>
      tpu.vector_store %arg21[%c0_82, %c0_83], %163 {strides = array<i32>} : memref<16x128xf32, #tpu.memory_space<vmem>>, vector<16x128xf32>,
    } else {
    }
    %c0 = arith.constant 0 : index
    %c0_1 = arith.constant 0 : index
    %3 = vector.load %arg21[%c0, %c0_1] : memref<16x128xf32, #tpu.memory_space<vmem>>, vector<16x128xf32>
    %4 = arith.truncf %3 : vector<16x128xf32> to vector<16x128xbf16>
    %c0_2 = arith.constant 0 : index
    %c0_3 = arith.constant 0 : index
    %c0_4 = arith.constant 0 : index
    %5 = vector.load %arg6[%c0_2, %c0_3, %c0_4] : memref<1x128x128xbf16, #tpu.memory_space<vmem>>, vector<1x128x128xbf16>
    %6 = vector.shape_cast %5 : vector<1x128x128xbf16> to vector<128x128xbf16>
    %cst = arith.constant dense<0.000000e+00> : vector<16x128xf32>
    %7 = tpu.matmul %4, %6, %cst {dimension_numbers = #tpu.dot_dimension_numbers<[1], [0], [0], [1], [0, 0, 1, 1], [], []>} : vector<16x128xbf16>, vector<128x128xbf16>, vector<16x128xf32> -> vector<16x128xf32>
    %c0_5 = arith.constant 0 : index
    %c0_6 = arith.constant 0 : index
    %c0_7 = arith.constant 0 : index
    %8 = vector.load %arg7[%c0_5, %c0_6, %c0_7] : memref<1x1x128xf32, #tpu.memory_space<vmem>>, vector<1x1x128xf32>
    %9 = vector.shape_cast %8 : vector<1x1x128xf32> to vector<1x128xf32>
    %10 = vector.broadcast %9 : vector<1x128xf32> to vector<16x128xf32>
    %11 = arith.addf %7, %10 : vector<16x128xf32>
    %c0_8 = arith.constant 0 : index
    %c0_9 = arith.constant 0 : index
    %c0_10 = arith.constant 0 : index
    %12 = vector.load %arg8[%c0_8, %c0_9, %c0_10] : memref<1x1x128xf32, #tpu.memory_space<vmem>>, vector<1x1x128xf32>
    %13 = vector.shape_cast %12 : vector<1x1x128xf32> to vector<1x128xf32>
    %cst_11 = arith.constant 0.000000e+00 : f32
    %14 = vector.broadcast %cst_11 : f32 to vector<16x128xf32>
    %15 = arith.cmpf oge, %11, %14 : vector<16x128xf32>
    %16 = vector.broadcast %13 : vector<1x128xf32> to vector<16x128xf32>
    %17 = arith.mulf %16, %11 : vector<16x128xf32>
    %18 = arith.select %15, %11, %17 : vector<16x128xi1>, vector<16x128xf32>
    %19 = vector.shape_cast %18 : vector<16x128xf32> to vector<1x16x128xf32>
    %cst_12 = arith.constant dense<0.000000e+00> : vector<1x128xf32>
    %20 = vector.multi_reduction <add>, %19, %cst_12 [1] : vector<1x16x128xf32> to vector<1x128xf32>
    %21 = vector.shape_cast %20 : vector<1x128xf32> to vector<1x1x128xf32>
    %cst_13 = arith.constant 1.600000e+01 : f32
    %22 = vector.broadcast %cst_13 : f32 to vector<1x1x128xf32>
    %23 = arith.divf %21, %22 : vector<1x1x128xf32>
    %24 = vector.broadcast %23 : vector<1x1x128xf32> to vector<1x16x128xf32>
    %25 = arith.subf %19, %24 : vector<1x16x128xf32>
    %26 = arith.mulf %25, %25 : vector<1x16x128xf32>
    %cst_14 = arith.constant dense<0.000000e+00> : vector<1x128xf32>
    %27 = vector.multi_reduction <add>, %26, %cst_14 [1] : vector<1x16x128xf32> to vector<1x128xf32>
    %28 = vector.shape_cast %27 : vector<1x128xf32> to vector<1x1x128xf32>
    %cst_15 = arith.constant 1.600000e+01 : f32
    %29 = vector.broadcast %cst_15 : f32 to vector<1x1x128xf32>
    %30 = arith.divf %28, %29 : vector<1x1x128xf32>
    %c0_16 = arith.constant 0 : index
    %c0_17 = arith.constant 0 : index
    %c0_18 = arith.constant 0 : index
    %31 = vector.load %arg9[%c0_16, %c0_17, %c0_18] : memref<1x1x128xf32, #tpu.memory_space<vmem>>, vector<1x1x128xf32>
    %32 = vector.shape_cast %31 : vector<1x1x128xf32> to vector<1x128xf32>
    %c0_19 = arith.constant 0 : index
    %c0_20 = arith.constant 0 : index
    %c0_21 = arith.constant 0 : index
    %33 = vector.load %arg10[%c0_19, %c0_20, %c0_21] : memref<1x1x128xf32, #tpu.memory_space<vmem>>, vector<1x1x128xf32>
    %34 = vector.shape_cast %33 : vector<1x1x128xf32> to vector<1x128xf32>
    %cst_22 = arith.constant 9.99999974E-6 : f32
    %35 = vector.broadcast %cst_22 : f32 to vector<1x1x128xf32>
    %36 = arith.addf %30, %35 : vector<1x1x128xf32>
    %37 = math.rsqrt %36 : vector<1x1x128xf32>
    %38 = vector.shape_cast %32 : vector<1x128xf32> to vector<1x1x128xf32>
    %39 = arith.mulf %38, %37 : vector<1x1x128xf32>
    %c0_23 = arith.constant 0 : index
    %c8 = arith.constant 8 : index
    %c0_24 = arith.constant 0 : index
    %40 = vector.load %arg22[%c0_23, %c8, %c0_24] : memref<1x26x128xf32, #tpu.memory_space<vmem>>, vector<1x16x128xf32>
    tpu.vector_store %arg22[%c0_23, %c8, %c0_24], %25 {strides = array<i32>} : memref<1x26x128xf32, #tpu.memory_space<vmem>>, vector<1x16x128xf32>,
    %cst_25 = arith.constant 0.000000e+00 : f32
    %41 = vector.broadcast %cst_25 : f32 to vector<1x1x128xf32>
    %42 = arith.cmpf oeq, %39, %41 : vector<1x1x128xf32>
    %cst_26 = arith.constant 1.000000e+00 : f32
    %43 = vector.broadcast %cst_26 : f32 to vector<1x1x128xf32>
    %44 = arith.select %42, %43, %39 : vector<1x1x128xi1>, vector<1x1x128xf32>
    %cst_27 = arith.constant 0.000000e+00 : f32
    %45 = vector.broadcast %cst_27 : f32 to vector<1x128xf32>
    %46 = arith.subf %45, %34 : vector<1x128xf32>
    %47 = vector.shape_cast %46 : vector<1x128xf32> to vector<1x1x128xf32>
    %48 = arith.divf %47, %44 : vector<1x1x128xf32>
    %49 = vector.shape_cast %48 : vector<1x1x128xf32> to vector<1x1x128xf32>
    %50 = vector.broadcast %49 : vector<1x1x128xf32> to vector<1x8x128xf32>
    %c0_28 = arith.constant 0 : index
    %c0_29 = arith.constant 0 : index
    %c0_30 = arith.constant 0 : index
    %51 = vector.load %arg22[%c0_28, %c0_29, %c0_30] : memref<1x26x128xf32, #tpu.memory_space<vmem>>, vector<1x8x128xf32>
    tpu.vector_store %arg22[%c0_28, %c0_29, %c0_30], %50 {strides = array<i32>} : memref<1x26x128xf32, #tpu.memory_space<vmem>>, vector<1x8x128xf32>,
    %52 = vector.shape_cast %48 : vector<1x1x128xf32> to vector<1x1x128xf32>
    %53 = vector.broadcast %52 : vector<1x1x128xf32> to vector<1x2x128xf32>
    %c0_31 = arith.constant 0 : index
    %c24 = arith.constant 24 : index
    %c0_32 = arith.constant 0 : index
    %54 = vector.load %arg22[%c0_31, %c24, %c0_32] : memref<1x26x128xf32, #tpu.memory_space<vmem>>, vector<1x2x128xf32>
    tpu.vector_store %arg22[%c0_31, %c24, %c0_32], %53 {strides = array<i32>} : memref<1x26x128xf32, #tpu.memory_space<vmem>>, vector<1x2x128xf32>,
    %55 = arith.index_cast %arg1 : i32 to index
    %56 = memref.load %arg2[%55] : memref<2xi32, #tpu.memory_space<smem>>
    %c0_33 = arith.constant 0 : index
    %c0_34 = arith.constant 0 : index
    %c0_35 = arith.constant 0 : index
    %57 = vector.load %arg11[%c0_33, %c0_34, %c0_35] : memref<1x3x128xf32, #tpu.memory_space<vmem>>, vector<1x3x128xf32>
    %58 = vector.shape_cast %57 : vector<1x3x128xf32> to vector<3x128xf32>
    %c-1_i32 = arith.constant -1 : i32
    %59 = arith.muli %c-1_i32, %56 : i32
    %c8_i32 = arith.constant 8 : i32
    %60 = arith.addi %c8_i32, %59 : i32
    %c0_36 = arith.constant 0 : index
    %61 = arith.index_cast %60 : i32 to index
    %c0_37 = arith.constant 0 : index
    %62 = vector.load %arg22[%c0_36, %61, %c0_37] : memref<1x26x128xf32, #tpu.memory_space<vmem>>, vector<1x16x128xf32>
    %63 = vector.extract_strided_slice %58 {offsets = [0, 0], sizes = [1, 128], strides = [1, 1]} : vector<3x128xf32> to vector<1x128xf32>
    %64 = vector.shape_cast %63 : vector<1x128xf32> to vector<128xf32>
    %65 = vector.shape_cast %64 : vector<128xf32> to vector<1x128xf32>
    %66 = vector.shape_cast %65 : vector<1x128xf32> to vector<1x1x128xf32>
    %67 = arith.mulf %66, %39 : vector<1x1x128xf32>
    %68 = vector.broadcast %67 : vector<1x1x128xf32> to vector<1x16x128xf32>
    %69 = arith.mulf %62, %68 : vector<1x16x128xf32>
    %70 = vector.extract_strided_slice %58 {offsets = [0, 0], sizes = [1, 128], strides = [1, 1]} : vector<3x128xf32> to vector<1x128xf32>
    %71 = vector.shape_cast %70 : vector<1x128xf32> to vector<128xf32>
    %c0_i32_38 = arith.constant 0 : i32
    %72 = arith.muli %c0_i32_38, %56 : i32
    %c8_i32_39 = arith.constant 8 : i32
    %73 = arith.addi %c8_i32_39, %72 : i32
    %c0_40 = arith.constant 0 : index
    %74 = arith.index_cast %73 : i32 to index
    %c0_41 = arith.constant 0 : index
    %75 = vector.load %arg22[%c0_40, %74, %c0_41] : memref<1x26x128xf32, #tpu.memory_space<vmem>>, vector<1x16x128xf32>
    %76 = vector.extract_strided_slice %58 {offsets = [1, 0], sizes = [1, 128], strides = [1, 1]} : vector<3x128xf32> to vector<1x128xf32>
    %77 = vector.shape_cast %76 : vector<1x128xf32> to vector<128xf32>
    %78 = vector.shape_cast %77 : vector<128xf32> to vector<1x128xf32>
    %79 = vector.shape_cast %78 : vector<1x128xf32> to vector<1x1x128xf32>
    %80 = arith.mulf %79, %39 : vector<1x1x128xf32>
    %81 = vector.broadcast %80 : vector<1x1x128xf32> to vector<1x16x128xf32>
    %82 = arith.mulf %75, %81 : vector<1x16x128xf32>
    %83 = arith.addf %69, %82 : vector<1x16x128xf32>
    %84 = vector.extract_strided_slice %58 {offsets = [1, 0], sizes = [1, 128], strides = [1, 1]} : vector<3x128xf32> to vector<1x128xf32>
    %85 = vector.shape_cast %84 : vector<1x128xf32> to vector<128xf32>
    %86 = arith.addf %71, %85 : vector<128xf32>
    %c1_i32 = arith.constant 1 : i32
    %87 = arith.muli %c1_i32, %56 : i32
    %c8_i32_42 = arith.constant 8 : i32
    %88 = arith.addi %c8_i32_42, %87 : i32
    %c0_43 = arith.constant 0 : index
    %89 = arith.index_cast %88 : i32 to index
    %c0_44 = arith.constant 0 : index
    %90 = vector.load %arg22[%c0_43, %89, %c0_44] : memref<1x26x128xf32, #tpu.memory_space<vmem>>, vector<1x16x128xf32>
    %91 = vector.extract_strided_slice %58 {offsets = [2, 0], sizes = [1, 128], strides = [1, 1]} : vector<3x128xf32> to vector<1x128xf32>
    %92 = vector.shape_cast %91 : vector<1x128xf32> to vector<128xf32>
    %93 = vector.shape_cast %92 : vector<128xf32> to vector<1x128xf32>
    %94 = vector.shape_cast %93 : vector<1x128xf32> to vector<1x1x128xf32>
    %95 = arith.mulf %94, %39 : vector<1x1x128xf32>
    %96 = vector.broadcast %95 : vector<1x1x128xf32> to vector<1x16x128xf32>
    %97 = arith.mulf %90, %96 : vector<1x16x128xf32>
    %98 = arith.addf %83, %97 : vector<1x16x128xf32>
    %99 = vector.extract_strided_slice %58 {offsets = [2, 0], sizes = [1, 128], strides = [1, 1]} : vector<3x128xf32> to vector<1x128xf32>
    %100 = vector.shape_cast %99 : vector<1x128xf32> to vector<128xf32>
    %101 = arith.addf %86, %100 : vector<128xf32>
    %102 = vector.shape_cast %101 : vector<128xf32> to vector<1x128xf32>
    %103 = arith.mulf %34, %102 : vector<1x128xf32>
    %c0_45 = arith.constant 0 : index
    %c0_46 = arith.constant 0 : index
    %c0_47 = arith.constant 0 : index
    %104 = vector.load %arg12[%c0_45, %c0_46, %c0_47] : memref<1x1x128xf32, #tpu.memory_space<vmem>>, vector<1x1x128xf32>
    %105 = vector.shape_cast %104 : vector<1x1x128xf32> to vector<1x128xf32>
    %106 = arith.addf %103, %105 : vector<1x128xf32>
    %107 = vector.shape_cast %106 : vector<1x128xf32> to vector<1x1x128xf32>
    %108 = vector.broadcast %107 : vector<1x1x128xf32> to vector<1x16x128xf32>
    %109 = arith.addf %98, %108 : vector<1x16x128xf32>
    %c0_48 = arith.constant 0 : index
    %c0_49 = arith.constant 0 : index
    %c0_50 = arith.constant 0 : index
    %110 = vector.load %arg13[%c0_48, %c0_49, %c0_50] : memref<1x1x128xf32, #tpu.memory_space<vmem>>, vector<1x1x128xf32>
    %111 = vector.shape_cast %110 : vector<1x1x128xf32> to vector<1x128xf32>
    %cst_51 = arith.constant 0.000000e+00 : f32
    %112 = vector.broadcast %cst_51 : f32 to vector<1x16x128xf32>
    %113 = arith.cmpf oge, %109, %112 : vector<1x16x128xf32>
    %114 = vector.shape_cast %111 : vector<1x128xf32> to vector<1x1x128xf32>
    %115 = vector.broadcast %114 : vector<1x1x128xf32> to vector<1x16x128xf32>
    %116 = arith.mulf %115, %109 : vector<1x16x128xf32>
    %117 = arith.select %113, %109, %116 : vector<1x16x128xi1>, vector<1x16x128xf32>
    %cst_52 = arith.constant dense<0.000000e+00> : vector<1x128xf32>
    %118 = vector.multi_reduction <add>, %117, %cst_52 [1] : vector<1x16x128xf32> to vector<1x128xf32>
    %119 = vector.shape_cast %118 : vector<1x128xf32> to vector<1x1x128xf32>
    %cst_53 = arith.constant 1.600000e+01 : f32
    %120 = vector.broadcast %cst_53 : f32 to vector<1x1x128xf32>
    %121 = arith.divf %119, %120 : vector<1x1x128xf32>
    %122 = vector.broadcast %121 : vector<1x1x128xf32> to vector<1x16x128xf32>
    %123 = arith.subf %117, %122 : vector<1x16x128xf32>
    %124 = arith.mulf %123, %123 : vector<1x16x128xf32>
    %cst_54 = arith.constant dense<0.000000e+00> : vector<1x128xf32>
    %125 = vector.multi_reduction <add>, %124, %cst_54 [1] : vector<1x16x128xf32> to vector<1x128xf32>
    %126 = vector.shape_cast %125 : vector<1x128xf32> to vector<1x1x128xf32>
    %cst_55 = arith.constant 1.600000e+01 : f32
    %127 = vector.broadcast %cst_55 : f32 to vector<1x1x128xf32>
    %128 = arith.divf %126, %127 : vector<1x1x128xf32>
    %c0_56 = arith.constant 0 : index
    %c0_57 = arith.constant 0 : index
    %c0_58 = arith.constant 0 : index
    %129 = vector.load %arg14[%c0_56, %c0_57, %c0_58] : memref<1x1x128xf32, #tpu.memory_space<vmem>>, vector<1x1x128xf32>
    %130 = vector.shape_cast %129 : vector<1x1x128xf32> to vector<1x128xf32>
    %cst_59 = arith.constant 9.99999974E-6 : f32
    %131 = vector.broadcast %cst_59 : f32 to vector<1x1x128xf32>
    %132 = arith.addf %128, %131 : vector<1x1x128xf32>
    %133 = math.rsqrt %132 : vector<1x1x128xf32>
    %134 = vector.shape_cast %130 : vector<1x128xf32> to vector<1x1x128xf32>
    %135 = arith.mulf %134, %133 : vector<1x1x128xf32>
    %136 = vector.broadcast %135 : vector<1x1x128xf32> to vector<1x16x128xf32>
    %137 = arith.mulf %123, %136 : vector<1x16x128xf32>
    %c0_60 = arith.constant 0 : index
    %c0_61 = arith.constant 0 : index
    %c0_62 = arith.constant 0 : index
    %138 = vector.load %arg15[%c0_60, %c0_61, %c0_62] : memref<1x1x128xf32, #tpu.memory_space<vmem>>, vector<1x1x128xf32>
    %139 = vector.shape_cast %138 : vector<1x1x128xf32> to vector<1x128xf32>
    %140 = vector.shape_cast %139 : vector<1x128xf32> to vector<1x1x128xf32>
    %141 = vector.broadcast %140 : vector<1x1x128xf32> to vector<1x16x128xf32>
    %142 = arith.addf %137, %141 : vector<1x16x128xf32>
    %143 = vector.shape_cast %142 : vector<1x16x128xf32> to vector<16x128xf32>
    %144 = arith.truncf %143 : vector<16x128xf32> to vector<16x128xbf16>
    %c0_63 = arith.constant 0 : index
    %c0_64 = arith.constant 0 : index
    %c0_65 = arith.constant 0 : index
    %145 = vector.load %arg16[%c0_63, %c0_64, %c0_65] : memref<1x128x128xbf16, #tpu.memory_space<vmem>>, vector<1x128x128xbf16>
    %146 = vector.shape_cast %145 : vector<1x128x128xbf16> to vector<128x128xbf16>
    %cst_66 = arith.constant dense<0.000000e+00> : vector<16x128xf32>
    %147 = tpu.matmul %144, %146, %cst_66 {dimension_numbers = #tpu.dot_dimension_numbers<[1], [0], [0], [1], [0, 0, 1, 1], [], []>} : vector<16x128xbf16>, vector<128x128xbf16>, vector<16x128xf32> -> vector<16x128xf32>
    %148 = arith.addf %3, %147 : vector<16x128xf32>
    %c0_67 = arith.constant 0 : index
    %c0_68 = arith.constant 0 : index
    %c0_69 = arith.constant 0 : index
    %149 = vector.load %arg17[%c0_67, %c0_68, %c0_69] : memref<1x1x128xf32, #tpu.memory_space<vmem>>, vector<1x1x128xf32>
    %150 = vector.shape_cast %149 : vector<1x1x128xf32> to vector<1x128xf32>
    %151 = vector.broadcast %150 : vector<1x128xf32> to vector<16x128xf32>
    %152 = arith.addf %148, %151 : vector<16x128xf32>
    %c0_70 = arith.constant 0 : index
    %c0_71 = arith.constant 0 : index
    %153 = vector.load %arg21[%c0_70, %c0_71] : memref<16x128xf32, #tpu.memory_space<vmem>>, vector<16x128xf32>
    tpu.vector_store %arg21[%c0_70, %c0_71], %152 {strides = array<i32>} : memref<16x128xf32, #tpu.memory_space<vmem>>, vector<16x128xf32>,
    %c1_i32_72 = arith.constant 1 : i32
    %154 = arith.cmpi eq, %arg1, %c1_i32_72 : i32
    %155 = arith.extui %154 : i1 to i32
    %c0_i32_73 = arith.constant 0 : i32
    %156 = arith.cmpi ne, %155, %c0_i32_73 : i32
    scf.if %156 {
      %157 = arith.truncf %152 : vector<16x128xf32> to vector<16x128xbf16>
      %c0_74 = arith.constant 0 : index
      %c0_75 = arith.constant 0 : index
      %158 = vector.load %arg18[%c0_74, %c0_75] : memref<128x128xbf16, #tpu.memory_space<vmem>>, vector<128x128xbf16>
      %cst_76 = arith.constant dense<0.000000e+00> : vector<16x128xf32>
      %159 = tpu.matmul %157, %158, %cst_76 {dimension_numbers = #tpu.dot_dimension_numbers<[1], [0], [0], [1], [0, 0, 1, 1], [], []>} : vector<16x128xbf16>, vector<128x128xbf16>, vector<16x128xf32> -> vector<16x128xf32>
      %c0_77 = arith.constant 0 : index
      %c0_78 = arith.constant 0 : index
      %160 = vector.load %arg19[%c0_77, %c0_78] : memref<1x128xf32, #tpu.memory_space<vmem>>, vector<1x128xf32>
      %161 = vector.broadcast %160 : vector<1x128xf32> to vector<16x128xf32>
      %162 = arith.addf %159, %161 : vector<16x128xf32>
      %163 = vector.shape_cast %162 : vector<16x128xf32> to vector<1x16x128xf32>
      %164 = arith.truncf %163 : vector<1x16x128xf32> to vector<1x16x128xbf16>
      %c0_79 = arith.constant 0 : index
      %c0_80 = arith.constant 0 : index
      %c0_81 = arith.constant 0 : index
      %165 = vector.load %arg20[%c0_79, %c0_80, %c0_81] : memref<1x16x128xbf16, #tpu.memory_space<vmem>>, vector<1x16x128xbf16>
      tpu.vector_store %arg20[%c0_79, %c0_80, %c0_81], %164 {strides = array<i32>} : memref<1x16x128xbf16, #tpu.memory_space<vmem>>, vector<1x16x128xbf16>,
    } else {
    }
    return
  }
  func.func @transform_0(%arg0: i32, %arg1: i32, %arg2: memref<2xi32, #tpu.memory_space<smem>>) -> (i32, i32, i32) {
    %c0_i32 = arith.constant 0 : i32
    %c0_i32_0 = arith.constant 0 : i32
    %c0_i32_1 = arith.constant 0 : i32
    return %arg0, %c0_i32, %c0_i32_0 : i32, i32, i32
  }
  func.func @transform_1(%arg0: i32, %arg1: i32, %arg2: memref<2xi32, #tpu.memory_space<smem>>) -> (i32, i32) {
    %c0_i32 = arith.constant 0 : i32
    %c0_i32_0 = arith.constant 0 : i32
    %c0_i32_1 = arith.constant 0 : i32
    return %c0_i32, %c0_i32_0 : i32, i32
  }
  func.func @transform_2(%arg0: i32, %arg1: i32, %arg2: memref<2xi32, #tpu.memory_space<smem>>) -> (i32, i32) {
    %c0_i32 = arith.constant 0 : i32
    %c0_i32_0 = arith.constant 0 : i32
    %c0_i32_1 = arith.constant 0 : i32
    return %c0_i32, %c0_i32_0 : i32, i32
  }
  func.func @transform_3(%arg0: i32, %arg1: i32, %arg2: memref<2xi32, #tpu.memory_space<smem>>) -> (i32, i32, i32) {
    %c0_i32 = arith.constant 0 : i32
    %c0_i32_0 = arith.constant 0 : i32
    %c0_i32_1 = arith.constant 0 : i32
    return %arg1, %c0_i32, %c0_i32_0 : i32, i32, i32
  }
  func.func @transform_4(%arg0: i32, %arg1: i32, %arg2: memref<2xi32, #tpu.memory_space<smem>>) -> (i32, i32, i32) {
    %c0_i32 = arith.constant 0 : i32
    %c0_i32_0 = arith.constant 0 : i32
    %c0_i32_1 = arith.constant 0 : i32
    return %arg1, %c0_i32, %c0_i32_0 : i32, i32, i32
  }
  func.func @transform_5(%arg0: i32, %arg1: i32, %arg2: memref<2xi32, #tpu.memory_space<smem>>) -> (i32, i32, i32) {
    %c0_i32 = arith.constant 0 : i32
    %c0_i32_0 = arith.constant 0 : i32
    %c0_i32_1 = arith.constant 0 : i32
    return %arg1, %c0_i32, %c0_i32_0 : i32, i32, i32
  }
  func.func @transform_6(%arg0: i32, %arg1: i32, %arg2: memref<2xi32, #tpu.memory_space<smem>>) -> (i32, i32, i32) {
    %c0_i32 = arith.constant 0 : i32
    %c0_i32_0 = arith.constant 0 : i32
    %c0_i32_1 = arith.constant 0 : i32
    return %arg1, %c0_i32, %c0_i32_0 : i32, i32, i32
  }
  func.func @transform_7(%arg0: i32, %arg1: i32, %arg2: memref<2xi32, #tpu.memory_space<smem>>) -> (i32, i32, i32) {
    %c0_i32 = arith.constant 0 : i32
    %c0_i32_0 = arith.constant 0 : i32
    %c0_i32_1 = arith.constant 0 : i32
    return %arg1, %c0_i32, %c0_i32_0 : i32, i32, i32
  }
  func.func @transform_8(%arg0: i32, %arg1: i32, %arg2: memref<2xi32, #tpu.memory_space<smem>>) -> (i32, i32, i32) {
    %c0_i32 = arith.constant 0 : i32
    %c0_i32_0 = arith.constant 0 : i32
    %c0_i32_1 = arith.constant 0 : i32
    return %arg1, %c0_i32, %c0_i32_0 : i32, i32, i32
  }
  func.func @transform_9(%arg0: i32, %arg1: i32, %arg2: memref<2xi32, #tpu.memory_space<smem>>) -> (i32, i32, i32) {
    %c0_i32 = arith.constant 0 : i32
    %c0_i32_0 = arith.constant 0 : i32
    %c0_i32_1 = arith.constant 0 : i32
    return %arg1, %c0_i32, %c0_i32_0 : i32, i32, i32
  }
  func.func @transform_10(%arg0: i32, %arg1: i32, %arg2: memref<2xi32, #tpu.memory_space<smem>>) -> (i32, i32, i32) {
    %c0_i32 = arith.constant 0 : i32
    %c0_i32_0 = arith.constant 0 : i32
    %c0_i32_1 = arith.constant 0 : i32
    return %arg1, %c0_i32, %c0_i32_0 : i32, i32, i32
  }
  func.func @transform_11(%arg0: i32, %arg1: i32, %arg2: memref<2xi32, #tpu.memory_space<smem>>) -> (i32, i32, i32) {
    %c0_i32 = arith.constant 0 : i32
    %c0_i32_0 = arith.constant 0 : i32
    %c0_i32_1 = arith.constant 0 : i32
    return %arg1, %c0_i32, %c0_i32_0 : i32, i32, i32
  }
  func.func @transform_12(%arg0: i32, %arg1: i32, %arg2: memref<2xi32, #tpu.memory_space<smem>>) -> (i32, i32, i32) {
    %c0_i32 = arith.constant 0 : i32
    %c0_i32_0 = arith.constant 0 : i32
    %c0_i32_1 = arith.constant 0 : i32
    return %arg1, %c0_i32, %c0_i32_0 : i32, i32, i32
  }
  func.func @transform_13(%arg0: i32, %arg1: i32, %arg2: memref<2xi32, #tpu.memory_space<smem>>) -> (i32, i32, i32) {
    %c0_i32 = arith.constant 0 : i32
    %c0_i32_0 = arith.constant 0 : i32
    %c0_i32_1 = arith.constant 0 : i32
    return %arg1, %c0_i32, %c0_i32_0 : i32, i32, i32
  }
  func.func @transform_14(%arg0: i32, %arg1: i32, %arg2: memref<2xi32, #tpu.memory_space<smem>>) -> (i32, i32, i32) {
    %c0_i32 = arith.constant 0 : i32
    %c0_i32_0 = arith.constant 0 : i32
    %c0_i32_1 = arith.constant 0 : i32
    return %arg1, %c0_i32, %c0_i32_0 : i32, i32, i32
  }
  func.func @transform_15(%arg0: i32, %arg1: i32, %arg2: memref<2xi32, #tpu.memory_space<smem>>) -> (i32, i32) {
    %c0_i32 = arith.constant 0 : i32
    %c0_i32_0 = arith.constant 0 : i32
    %c0_i32_1 = arith.constant 0 : i32
    return %c0_i32, %c0_i32_0 : i32, i32
  }
  func.func @transform_16(%arg0: i32, %arg1: i32, %arg2: memref<2xi32, #tpu.memory_space<smem>>) -> (i32, i32) {
    %c0_i32 = arith.constant 0 : i32
    %c0_i32_0 = arith.constant 0 : i32
    %c0_i32_1 = arith.constant 0 : i32
    return %c0_i32, %c0_i32_0 : i32, i32
  }
  func.func @transform_17(%arg0: i32, %arg1: i32, %arg2: memref<2xi32, #tpu.memory_space<smem>>) -> (i32, i32, i32) {
    %c0_i32 = arith.constant 0 : i32
    %c0_i32_0 = arith.constant 0 : i32
    %c0_i32_1 = arith.constant 0 : i32
    return %arg0, %c0_i32, %c0_i32_0 : i32, i32, i32
  }
}

</mosaic_0001>

<llo_original>
// kernel: tpu_custom_call.1
$region0: #{tpu_custom_call.1}
  #allocation0 [shape = 'u32[]', space=smem, size = 0x4, offset = 0x4, fixed_abs, tag = 'smem constant byte address 0x4 - core index']
  #allocation1 [shape = 'u32[144,128]{1,0:T(1,128)}', space=vmem, size = 0x12000, scoped, tag = 'internal scratch']
  #allocation2 [shape = 'f32[16,128]{1,0:T(8,128)}', space=vmem, size = 0x2000, scoped, tag = 'scratch operand']
  #allocation3 [shape = 'f32[1,26,128]{2,1,0:T(8,128)}', space=vmem, size = 0x4000, scoped, tag = 'scratch operand']
  #allocation4 [shape = 's32[1]{0}', space=sflag, size = 0x4, scoped, tag = 'scoped memory for tpu_custom_call.1']
  #allocation5 [shape = 'u8[512]{0}', space=smem, size = 0x200, scoped, tag = 'prefetched SMEM operand 0']
  %s0 = inlined_call_operand.hbm [shape: s32[2], index: 0, kind: input, shape index: {}]
  %s1 = inlined_call_operand.hbm [shape: bf16[2,16,48], index: 1, kind: input, shape index: {}]
  %s2 = inlined_call_operand.hbm [shape: bf16[48,128], index: 2, kind: input, shape index: {}]
  %s3 = inlined_call_operand.hbm [shape: f32[1,128], index: 3, kind: input, shape index: {}]
  %s4 = inlined_call_operand.hbm [shape: bf16[2,128,128], index: 4, kind: input, shape index: {}]
  %s5 = inlined_call_operand.vmem [shape: f32[2,1,128], index: 5, kind: input, shape index: {}]
  %s6 = inlined_call_operand.vmem [shape: f32[2,1,128], index: 6, kind: input, shape index: {}]
  %s7 = inlined_call_operand.vmem [shape: f32[2,1,128], index: 7, kind: input, shape index: {}]
  %s8 = inlined_call_operand.vmem [shape: f32[2,1,128], index: 8, kind: input, shape index: {}]
  %s9 = inlined_call_operand.vmem [shape: f32[2,3,128], index: 9, kind: input, shape index: {}]
  %s10 = inlined_call_operand.vmem [shape: f32[2,1,128], index: 10, kind: input, shape index: {}]
  %s11 = inlined_call_operand.hbm [shape: f32[2,1,128], index: 11, kind: input, shape index: {}]
  %s12 = inlined_call_operand.hbm [shape: f32[2,1,128], index: 12, kind: input, shape index: {}]
  %s13 = inlined_call_operand.hbm [shape: f32[2,1,128], index: 13, kind: input, shape index: {}]
  %s14 = inlined_call_operand.hbm [shape: bf16[2,128,128], index: 14, kind: input, shape index: {}]
  %s15 = inlined_call_operand.hbm [shape: f32[2,1,128], index: 15, kind: input, shape index: {}]
  %s16 = inlined_call_operand.vmem [shape: bf16[128,128], index: 16, kind: input, shape index: {}]
  %s17 = inlined_call_operand.vmem [shape: f32[1,128], index: 17, kind: input, shape index: {}]
  %s18 = inlined_call_operand.hbm [shape: bf16[2,16,128], index: 18, kind: output, shape index: {}]
  %s19 = sld [smem:[#allocation0]]
  $region145: #{tpu_custom_call.1} parent=0
    _
  %s21 = ssub.s32 1, %s19
  %s22 = scalar_select 0, %s21, %s19
  %24 = dma.hbm_to_smem %s0, 16, [#allocation5], [#allocation4]
  %25 = dma.done [#allocation4], 16
  %26 = sfence
  $region1: #{tpu_custom_call.1} parent=0
    #allocation6 [shape = 'u8[8192]{0}', space=vmem, size = 0x2000, scoped, tag = 'input window, operand 1']
    #allocation7 [shape = 's32[2]{0}', space=sflag, size = 0x8, scoped, tag = 'scoped memory for tpu_custom_call.1']
    #allocation8 [shape = 's32[2]{0}', space=sflag, size = 0x8, scoped, tag = 'scoped memory for tpu_custom_call.1']
    #allocation9 [shape = 'u8[12288]{0}', space=vmem, size = 0x3000, scoped, tag = 'input window, operand 2, single buffered']
    #allocation10 [shape = 's32[1]{0}', space=sflag, size = 0x4, scoped, tag = 'scoped memory for tpu_custom_call.1']
    #allocation11 [shape = 'u8[512]{0}', space=vmem, size = 0x400, scoped, tag = 'input window, operand 3, single buffered']
    #allocation12 [shape = 'u8[65536]{0}', space=vmem, size = 0x10000, scoped, tag = 'input window, operand 4']
    #allocation13 [shape = 's32[2]{0}', space=sflag, size = 0x8, scoped, tag = 'scoped memory for tpu_custom_call.1']
    #allocation14 [shape = 'u8[1024]{0}', space=vmem, size = 0x400, scoped, tag = 'input window, operand 11']
    #allocation15 [shape = 'u8[1024]{0}', space=vmem, size = 0x400, scoped, tag = 'input window, operand 12']
    #allocation16 [shape = 's32[2]{0}', space=sflag, size = 0x8, scoped, tag = 'scoped memory for tpu_custom_call.1']
    #allocation17 [shape = 'u8[1024]{0}', space=vmem, size = 0x400, scoped, tag = 'input window, operand 13']
    #allocation18 [shape = 'u8[65536]{0}', space=vmem, size = 0x10000, scoped, tag = 'input window, operand 14']
    #allocation19 [shape = 's32[2]{0}', space=sflag, size = 0x8, scoped, tag = 'scoped memory for tpu_custom_call.1']
    #allocation20 [shape = 'u8[1024]{0}', space=vmem, size = 0x400, scoped, tag = 'input window, operand 15']
    #allocation21 [shape = 'u8[8192]{0}', space=vmem, size = 0x2000, scoped, tag = 'output window, operand 0']
    %27 = vsyncpa [#allocation7], 0
    %s28 = scalar_lea.sflag [#allocation7], 1
    %29 = vsyncpa %s28, 0
    %30 = vsyncpa [#allocation10], 0
    %31 = vsyncpa [#allocation13], 0
    %s32 = scalar_lea.sflag [#allocation13], 1
    %33 = vsyncpa %s32, 0
    %34 = vsyncpa [#allocation16], 0
    %s35 = scalar_lea.sflag [#allocation16], 1
    %36 = vsyncpa %s35, 0
    %37 = vsyncpa [#allocation19], 0
    %s38 = scalar_lea.sflag [#allocation19], 1
    %39 = vsyncpa %s38, 0
    %40 = vsyncpa [#allocation8], 0
    %s41 = scalar_lea.sflag [#allocation8], 1
    %42 = vsyncpa %s41, 0
    loop: start=0, step=1, limit=6
    $region2: #{tpu_custom_call.1} parent=1 // loop_pre_header
      _
    $region3: #{tpu_custom_call.1} parent=1 // loop_header
      %s44 = sphi 0, %s48
      %p45 = scmp.ge.s32.totalorder %s44, 6
      %s51 = sphi 0, %s63
      %s52 = sphi 0, %s59
      %s53 = sphi 0, %s51
      %s54 = sphi 0, %s52
      %s55 = sphi 0, %s53
      %s56 = sphi 0, %s54
      %s66 = sphi 0, %s68
      %s69 = sphi 0, %s66
      %s70 = sphi 0, %s69
      %s86 = sphi 0, %s70
      %s90 = sphi 0, %s90
      %s92 = sphi 0, %s90
      %s93 = sphi 0, %s92
      %s107 = sphi 0, %s93
      %s111 = sphi 0, %s111
      %s113 = sphi 0, %s111
      %s114 = sphi 0, %s113
      %s128 = sphi 0, %s114
      %s134 = sphi 0, %s136
      %s137 = sphi 0, %s134
      %s138 = sphi 0, %s137
      %s154 = sphi 0, %s138
      %s160 = sphi 0, %s162
      %s163 = sphi 0, %s160
      %s164 = sphi 0, %s163
      %s180 = sphi 0, %s164
      %s186 = sphi 0, %s188
      %s189 = sphi 0, %s186
      %s190 = sphi 0, %s189
      %s206 = sphi 0, %s190
      %s212 = sphi 0, %s214
      %s215 = sphi 0, %s212
      %s216 = sphi 0, %s215
      %s232 = sphi 0, %s216
      %s238 = sphi 0, %s240
      %s241 = sphi 0, %s238
      %s242 = sphi 0, %s241
      %s258 = sphi 0, %s242
      %s264 = sphi 0, %s266
      %s267 = sphi 0, %s264
      %s268 = sphi 0, %s267
      %s284 = sphi 0, %s268
      %s290 = sphi 0, %s292
      %s293 = sphi 0, %s290
      %s294 = sphi 0, %s293
      %s310 = sphi 0, %s294
      %s316 = sphi 0, %s318
      %s319 = sphi 0, %s316
      %s320 = sphi 0, %s319
      %s336 = sphi 0, %s320
      %s342 = sphi 0, %s344
      %s345 = sphi 0, %s342
      %s346 = sphi 0, %s345
      %s362 = sphi 0, %s346
      %s368 = sphi 0, %s370
      %s371 = sphi 0, %s368
      %s372 = sphi 0, %s371
      %s388 = sphi 0, %s372
      %s394 = sphi 0, %s396
      %s397 = sphi 0, %s394
      %s398 = sphi 0, %s397
      %s414 = sphi 0, %s398
      %s420 = sphi 0, %s422
      %s423 = sphi 0, %s420
      %s424 = sphi 0, %s423
      %s440 = sphi 0, %s424
      %s444 = sphi 0, %s444
      %s446 = sphi 0, %s444
      %s447 = sphi 0, %s446
      %s461 = sphi 0, %s447
      %s465 = sphi 0, %s465
      %s467 = sphi 0, %s465
      %s468 = sphi 0, %s467
      %s482 = sphi 0, %s468
      %s488 = sphi 0, %s490
      %s491 = sphi 0, %s488
      %s492 = sphi 0, %s491
      %s508 = sphi 0, %s492
    $region4: #{tpu_custom_call.1} parent=1 // loop_header_branch
      %47 = sbr.rel (%p45) target = $region8
    $region5: #{tpu_custom_call.1} parent=1 // loop_body
      %s49 = ssub.s32 %s44, 1
      %s50 = ssub.s32 %s44, 2
      %s57 = sadd.s32 1, %s52
      %p58 = scmp.ge.s32.totalorder %s57, 2
      %s59 = scalar_select %p58, 0, %s57
      %s60 = sadd.s32 1, %s51
      %s61 = scalar_select %p58, %s60, %s51
      %p62 = scmp.ge.s32.totalorder %s61, 2
      %s63 = scalar_select %p62, 0, %s61
      %s64 = ssub.s32 %s51, %s63
      %p65 = scmp.eq.s32.totalorder %s64, 0
      %s67 = sadd.s32 %s66, 1
      %s68 = scalar_select %p65, %s66, %s67
      %p71 = pneg %p65
      %p72 = scmp.eq.s32.totalorder %s44, 3
      %p73 = por %p71, %p72
      %p74 = scmp.ne.s32.totalorder %s66, %s69
      %p75 = scmp.eq.s32.totalorder %s44, 0
      %p76 = por %p74, %p75
      %p77 = scmp.ne.s32.totalorder %s66, %s69
      %p78 = scmp.eq.s32.totalorder %s49, 3
      %p79 = por %p77, %p78
      %p80 = scmp.ne.s32.totalorder %s69, %s70
      %p81 = scmp.eq.s32.totalorder %s49, 0
      %p82 = por %p80, %p81
      %p83 = scmp.ne.s32.totalorder %s69, %s70
      %p84 = scmp.eq.s32.totalorder %s50, 3
      %p85 = por %p83, %p84
      %p87 = scmp.ne.s32.totalorder %s70, %s86
      %p88 = scmp.eq.s32.totalorder %s50, 0
      %p89 = por %p87, %p88
      %s91 = sadd.s32 %s90, 1
      %p94 = scmp.eq.s32.totalorder %s44, 3
      %p95 = scmp.ne.s32.totalorder %s90, %s92
      %p96 = scmp.eq.s32.totalorder %s44, 0
      %p97 = por %p95, %p96
      %p98 = scmp.ne.s32.totalorder %s90, %s92
      %p99 = scmp.eq.s32.totalorder %s49, 3
      %p100 = por %p98, %p99
      %p101 = scmp.ne.s32.totalorder %s92, %s93
      %p102 = scmp.eq.s32.totalorder %s49, 0
      %p103 = por %p101, %p102
      %p104 = scmp.ne.s32.totalorder %s92, %s93
      %p105 = scmp.eq.s32.totalorder %s50, 3
      %p106 = por %p104, %p105
      %p108 = scmp.ne.s32.totalorder %s93, %s107
      %p109 = scmp.eq.s32.totalorder %s50, 0
      %p110 = por %p108, %p109
      %s112 = sadd.s32 %s111, 1
      %p115 = scmp.eq.s32.totalorder %s44, 3
      %p116 = scmp.ne.s32.totalorder %s111, %s113
      %p117 = scmp.eq.s32.totalorder %s44, 0
      %p118 = por %p116, %p117
      %p119 = scmp.ne.s32.totalorder %s111, %s113
      %p120 = scmp.eq.s32.totalorder %s49, 3
      %p121 = por %p119, %p120
      %p122 = scmp.ne.s32.totalorder %s113, %s114
      %p123 = scmp.eq.s32.totalorder %s49, 0
      %p124 = por %p122, %p123
      %p125 = scmp.ne.s32.totalorder %s113, %s114
      %p126 = scmp.eq.s32.totalorder %s50, 3
      %p127 = por %p125, %p126
      %p129 = scmp.ne.s32.totalorder %s114, %s128
      %p130 = scmp.eq.s32.totalorder %s50, 0
      %p131 = por %p129, %p130
      %s132 = ssub.s32 %s52, %s59
      %p133 = scmp.eq.s32.totalorder %s132, 0
      %s135 = sadd.s32 %s134, 1
      %s136 = scalar_select %p133, %s134, %s135
      %p139 = pneg %p133
      %p140 = scmp.eq.s32.totalorder %s44, 3
      %p141 = por %p139, %p140
      %p142 = scmp.ne.s32.totalorder %s134, %s137
      %p143 = scmp.eq.s32.totalorder %s44, 0
      %p144 = por %p142, %p143
      %p145 = scmp.ne.s32.totalorder %s134, %s137
      %p146 = scmp.eq.s32.totalorder %s49, 3
      %p147 = por %p145, %p146
      %p148 = scmp.ne.s32.totalorder %s137, %s138
      %p149 = scmp.eq.s32.totalorder %s49, 0
      %p150 = por %p148, %p149
      %p151 = scmp.ne.s32.totalorder %s137, %s138
      %p152 = scmp.eq.s32.totalorder %s50, 3
      %p153 = por %p151, %p152
      %p155 = scmp.ne.s32.totalorder %s138, %s154
      %p156 = scmp.eq.s32.totalorder %s50, 0
      %p157 = por %p155, %p156
      %s158 = ssub.s32 %s52, %s59
      %p159 = scmp.eq.s32.totalorder %s158, 0
      %s161 = sadd.s32 %s160, 1
      %s162 = scalar_select %p159, %s160, %s161
      %p165 = pneg %p159
      %p166 = scmp.eq.s32.totalorder %s44, 3
      %p167 = por %p165, %p166
      %p168 = scmp.ne.s32.totalorder %s160, %s163
      %p169 = scmp.eq.s32.totalorder %s44, 0
      %p170 = por %p168, %p169
      %p171 = scmp.ne.s32.totalorder %s160, %s163
      %p172 = scmp.eq.s32.totalorder %s49, 3
      %p173 = por %p171, %p172
      %p174 = scmp.ne.s32.totalorder %s163, %s164
      %p175 = scmp.eq.s32.totalorder %s49, 0
      %p176 = por %p174, %p175
      %p177 = scmp.ne.s32.totalorder %s163, %s164
      %p178 = scmp.eq.s32.totalorder %s50, 3
      %p179 = por %p177, %p178
      %p181 = scmp.ne.s32.totalorder %s164, %s180
      %p182 = scmp.eq.s32.totalorder %s50, 0
      %p183 = por %p181, %p182
      %s184 = ssub.s32 %s52, %s59
      %p185 = scmp.eq.s32.totalorder %s184, 0
      %s187 = sadd.s32 %s186, 1
      %s188 = scalar_select %p185, %s186, %s187
      %p191 = pneg %p185
      %p192 = scmp.eq.s32.totalorder %s44, 3
      %p193 = por %p191, %p192
      %p194 = scmp.ne.s32.totalorder %s186, %s189
      %p195 = scmp.eq.s32.totalorder %s44, 0
      %p196 = por %p194, %p195
      %p197 = scmp.ne.s32.totalorder %s186, %s189
      %p198 = scmp.eq.s32.totalorder %s49, 3
      %p199 = por %p197, %p198
      %p200 = scmp.ne.s32.totalorder %s189, %s190
      %p201 = scmp.eq.s32.totalorder %s49, 0
      %p202 = por %p200, %p201
      %p203 = scmp.ne.s32.totalorder %s189, %s190
      %p204 = scmp.eq.s32.totalorder %s50, 3
      %p205 = por %p203, %p204
      %p207 = scmp.ne.s32.totalorder %s190, %s206
      %p208 = scmp.eq.s32.totalorder %s50, 0
      %p209 = por %p207, %p208
      %s210 = ssub.s32 %s52, %s59
      %p211 = scmp.eq.s32.totalorder %s210, 0
      %s213 = sadd.s32 %s212, 1
      %s214 = scalar_select %p211, %s212, %s213
      %p217 = pneg %p211
      %p218 = scmp.eq.s32.totalorder %s44, 3
      %p219 = por %p217, %p218
      %p220 = scmp.ne.s32.totalorder %s212, %s215
      %p221 = scmp.eq.s32.totalorder %s44, 0
      %p222 = por %p220, %p221
      %p223 = scmp.ne.s32.totalorder %s212, %s215
      %p224 = scmp.eq.s32.totalorder %s49, 3
      %p225 = por %p223, %p224
      %p226 = scmp.ne.s32.totalorder %s215, %s216
      %p227 = scmp.eq.s32.totalorder %s49, 0
      %p228 = por %p226, %p227
      %p229 = scmp.ne.s32.totalorder %s215, %s216
      %p230 = scmp.eq.s32.totalorder %s50, 3
      %p231 = por %p229, %p230
      %p233 = scmp.ne.s32.totalorder %s216, %s232
      %p234 = scmp.eq.s32.totalorder %s50, 0
      %p235 = por %p233, %p234
      %s236 = ssub.s32 %s52, %s59
      %p237 = scmp.eq.s32.totalorder %s236, 0
      %s239 = sadd.s32 %s238, 1
      %s240 = scalar_select %p237, %s238, %s239
      %p243 = pneg %p237
      %p244 = scmp.eq.s32.totalorder %s44, 3
      %p245 = por %p243, %p244
      %p246 = scmp.ne.s32.totalorder %s238, %s241
      %p247 = scmp.eq.s32.totalorder %s44, 0
      %p248 = por %p246, %p247
      %p249 = scmp.ne.s32.totalorder %s238, %s241
      %p250 = scmp.eq.s32.totalorder %s49, 3
      %p251 = por %p249, %p250
      %p252 = scmp.ne.s32.totalorder %s241, %s242
      %p253 = scmp.eq.s32.totalorder %s49, 0
      %p254 = por %p252, %p253
      %p255 = scmp.ne.s32.totalorder %s241, %s242
      %p256 = scmp.eq.s32.totalorder %s50, 3
      %p257 = por %p255, %p256
      %p259 = scmp.ne.s32.totalorder %s242, %s258
      %p260 = scmp.eq.s32.totalorder %s50, 0
      %p261 = por %p259, %p260
      %s262 = ssub.s32 %s52, %s59
      %p263 = scmp.eq.s32.totalorder %s262, 0
      %s265 = sadd.s32 %s264, 1
      %s266 = scalar_select %p263, %s264, %s265
      %p269 = pneg %p263
      %p270 = scmp.eq.s32.totalorder %s44, 3
      %p271 = por %p269, %p270
      %p272 = scmp.ne.s32.totalorder %s264, %s267
      %p273 = scmp.eq.s32.totalorder %s44, 0
      %p274 = por %p272, %p273
      %p275 = scmp.ne.s32.totalorder %s264, %s267
      %p276 = scmp.eq.s32.totalorder %s49, 3
      %p277 = por %p275, %p276
      %p278 = scmp.ne.s32.totalorder %s267, %s268
      %p279 = scmp.eq.s32.totalorder %s49, 0
      %p280 = por %p278, %p279
      %p281 = scmp.ne.s32.totalorder %s267, %s268
      %p282 = scmp.eq.s32.totalorder %s50, 3
      %p283 = por %p281, %p282
      %p285 = scmp.ne.s32.totalorder %s268, %s284
      %p286 = scmp.eq.s32.totalorder %s50, 0
      %p287 = por %p285, %p286
      %s288 = ssub.s32 %s52, %s59
      %p289 = scmp.eq.s32.totalorder %s288, 0
      %s291 = sadd.s32 %s290, 1
      %s292 = scalar_select %p289, %s290, %s291
      %p295 = pneg %p289
      %p296 = scmp.eq.s32.totalorder %s44, 3
      %p297 = por %p295, %p296
      %p298 = scmp.ne.s32.totalorder %s290, %s293
      %p299 = scmp.eq.s32.totalorder %s44, 0
      %p300 = por %p298, %p299
      %p301 = scmp.ne.s32.totalorder %s290, %s293
      %p302 = scmp.eq.s32.totalorder %s49, 3
      %p303 = por %p301, %p302
      %p304 = scmp.ne.s32.totalorder %s293, %s294
      %p305 = scmp.eq.s32.totalorder %s49, 0
      %p306 = por %p304, %p305
      %p307 = scmp.ne.s32.totalorder %s293, %s294
      %p308 = scmp.eq.s32.totalorder %s50, 3
      %p309 = por %p307, %p308
      %p311 = scmp.ne.s32.totalorder %s294, %s310
      %p312 = scmp.eq.s32.totalorder %s50, 0
      %p313 = por %p311, %p312
      %s314 = ssub.s32 %s52, %s59
      %p315 = scmp.eq.s32.totalorder %s314, 0
      %s317 = sadd.s32 %s316, 1
      %s318 = scalar_select %p315, %s316, %s317
      %p321 = pneg %p315
      %p322 = scmp.eq.s32.totalorder %s44, 3
      %p323 = por %p321, %p322
      %p324 = scmp.ne.s32.totalorder %s316, %s319
      %p325 = scmp.eq.s32.totalorder %s44, 0
      %p326 = por %p324, %p325
      %p327 = scmp.ne.s32.totalorder %s316, %s319
      %p328 = scmp.eq.s32.totalorder %s49, 3
      %p329 = por %p327, %p328
      %p330 = scmp.ne.s32.totalorder %s319, %s320
      %p331 = scmp.eq.s32.totalorder %s49, 0
      %p332 = por %p330, %p331
      %p333 = scmp.ne.s32.totalorder %s319, %s320
      %p334 = scmp.eq.s32.totalorder %s50, 3
      %p335 = por %p333, %p334
      %p337 = scmp.ne.s32.totalorder %s320, %s336
      %p338 = scmp.eq.s32.totalorder %s50, 0
      %p339 = por %p337, %p338
      %s340 = ssub.s32 %s52, %s59
      %p341 = scmp.eq.s32.totalorder %s340, 0
      %s343 = sadd.s32 %s342, 1
      %s344 = scalar_select %p341, %s342, %s343
      %p347 = pneg %p341
      %p348 = scmp.eq.s32.totalorder %s44, 3
      %p349 = por %p347, %p348
      %p350 = scmp.ne.s32.totalorder %s342, %s345
      %p351 = scmp.eq.s32.totalorder %s44, 0
      %p352 = por %p350, %p351
      %p353 = scmp.ne.s32.totalorder %s342, %s345
      %p354 = scmp.eq.s32.totalorder %s49, 3
      %p355 = por %p353, %p354
      %p356 = scmp.ne.s32.totalorder %s345, %s346
      %p357 = scmp.eq.s32.totalorder %s49, 0
      %p358 = por %p356, %p357
      %p359 = scmp.ne.s32.totalorder %s345, %s346
      %p360 = scmp.eq.s32.totalorder %s50, 3
      %p361 = por %p359, %p360
      %p363 = scmp.ne.s32.totalorder %s346, %s362
      %p364 = scmp.eq.s32.totalorder %s50, 0
      %p365 = por %p363, %p364
      %s366 = ssub.s32 %s52, %s59
      %p367 = scmp.eq.s32.totalorder %s366, 0
      %s369 = sadd.s32 %s368, 1
      %s370 = scalar_select %p367, %s368, %s369
      %p373 = pneg %p367
      %p374 = scmp.eq.s32.totalorder %s44, 3
      %p375 = por %p373, %p374
      %p376 = scmp.ne.s32.totalorder %s368, %s371
      %p377 = scmp.eq.s32.totalorder %s44, 0
      %p378 = por %p376, %p377
      %p379 = scmp.ne.s32.totalorder %s368, %s371
      %p380 = scmp.eq.s32.totalorder %s49, 3
      %p381 = por %p379, %p380
      %p382 = scmp.ne.s32.totalorder %s371, %s372
      %p383 = scmp.eq.s32.totalorder %s49, 0
      %p384 = por %p382, %p383
      %p385 = scmp.ne.s32.totalorder %s371, %s372
      %p386 = scmp.eq.s32.totalorder %s50, 3
      %p387 = por %p385, %p386
      %p389 = scmp.ne.s32.totalorder %s372, %s388
      %p390 = scmp.eq.s32.totalorder %s50, 0
      %p391 = por %p389, %p390
      %s392 = ssub.s32 %s52, %s59
      %p393 = scmp.eq.s32.totalorder %s392, 0
      %s395 = sadd.s32 %s394, 1
      %s396 = scalar_select %p393, %s394, %s395
      %p399 = pneg %p393
      %p400 = scmp.eq.s32.totalorder %s44, 3
      %p401 = por %p399, %p400
      %p402 = scmp.ne.s32.totalorder %s394, %s397
      %p403 = scmp.eq.s32.totalorder %s44, 0
      %p404 = por %p402, %p403
      %p405 = scmp.ne.s32.totalorder %s394, %s397
      %p406 = scmp.eq.s32.totalorder %s49, 3
      %p407 = por %p405, %p406
      %p408 = scmp.ne.s32.totalorder %s397, %s398
      %p409 = scmp.eq.s32.totalorder %s49, 0
      %p410 = por %p408, %p409
      %p411 = scmp.ne.s32.totalorder %s397, %s398
      %p412 = scmp.eq.s32.totalorder %s50, 3
      %p413 = por %p411, %p412
      %p415 = scmp.ne.s32.totalorder %s398, %s414
      %p416 = scmp.eq.s32.totalorder %s50, 0
      %p417 = por %p415, %p416
      %s418 = ssub.s32 %s52, %s59
      %p419 = scmp.eq.s32.totalorder %s418, 0
      %s421 = sadd.s32 %s420, 1
      %s422 = scalar_select %p419, %s420, %s421
      %p425 = pneg %p419
      %p426 = scmp.eq.s32.totalorder %s44, 3
      %p427 = por %p425, %p426
      %p428 = scmp.ne.s32.totalorder %s420, %s423
      %p429 = scmp.eq.s32.totalorder %s44, 0
      %p430 = por %p428, %p429
      %p431 = scmp.ne.s32.totalorder %s420, %s423
      %p432 = scmp.eq.s32.totalorder %s49, 3
      %p433 = por %p431, %p432
      %p434 = scmp.ne.s32.totalorder %s423, %s424
      %p435 = scmp.eq.s32.totalorder %s49, 0
      %p436 = por %p434, %p435
      %p437 = scmp.ne.s32.totalorder %s423, %s424
      %p438 = scmp.eq.s32.totalorder %s50, 3
      %p439 = por %p437, %p438
      %p441 = scmp.ne.s32.totalorder %s424, %s440
      %p442 = scmp.eq.s32.totalorder %s50, 0
      %p443 = por %p441, %p442
      %s445 = sadd.s32 %s444, 1
      %p448 = scmp.eq.s32.totalorder %s44, 3
      %p449 = scmp.ne.s32.totalorder %s444, %s446
      %p450 = scmp.eq.s32.totalorder %s44, 0
      %p451 = por %p449, %p450
      %p452 = scmp.ne.s32.totalorder %s444, %s446
      %p453 = scmp.eq.s32.totalorder %s49, 3
      %p454 = por %p452, %p453
      %p455 = scmp.ne.s32.totalorder %s446, %s447
      %p456 = scmp.eq.s32.totalorder %s49, 0
      %p457 = por %p455, %p456
      %p458 = scmp.ne.s32.totalorder %s446, %s447
      %p459 = scmp.eq.s32.totalorder %s50, 3
      %p460 = por %p458, %p459
      %p462 = scmp.ne.s32.totalorder %s447, %s461
      %p463 = scmp.eq.s32.totalorder %s50, 0
      %p464 = por %p462, %p463
      %s466 = sadd.s32 %s465, 1
      %p469 = scmp.eq.s32.totalorder %s44, 3
      %p470 = scmp.ne.s32.totalorder %s465, %s467
      %p471 = scmp.eq.s32.totalorder %s44, 0
      %p472 = por %p470, %p471
      %p473 = scmp.ne.s32.totalorder %s465, %s467
      %p474 = scmp.eq.s32.totalorder %s49, 3
      %p475 = por %p473, %p474
      %p476 = scmp.ne.s32.totalorder %s467, %s468
      %p477 = scmp.eq.s32.totalorder %s49, 0
      %p478 = por %p476, %p477
      %p479 = scmp.ne.s32.totalorder %s467, %s468
      %p480 = scmp.eq.s32.totalorder %s50, 3
      %p481 = por %p479, %p480
      %p483 = scmp.ne.s32.totalorder %s468, %s482
      %p484 = scmp.eq.s32.totalorder %s50, 0
      %p485 = por %p483, %p484
      %s486 = ssub.s32 %s51, %s63
      %p487 = scmp.eq.s32.totalorder %s486, 0
      %s489 = sadd.s32 %s488, 1
      %s490 = scalar_select %p487, %s488, %s489
      %p493 = pneg %p487
      %p494 = scmp.eq.s32.totalorder %s44, 3
      %p495 = por %p493, %p494
      %p496 = scmp.ne.s32.totalorder %s488, %s491
      %p497 = scmp.eq.s32.totalorder %s44, 0
      %p498 = por %p496, %p497
      %p499 = scmp.ne.s32.totalorder %s488, %s491
      %p500 = scmp.eq.s32.totalorder %s49, 3
      %p501 = por %p499, %p500
      %p502 = scmp.ne.s32.totalorder %s491, %s492
      %p503 = scmp.eq.s32.totalorder %s49, 0
      %p504 = por %p502, %p503
      %p505 = scmp.ne.s32.totalorder %s491, %s492
      %p506 = scmp.eq.s32.totalorder %s50, 3
      %p507 = por %p505, %p506
      %p509 = scmp.ne.s32.totalorder %s492, %s508
      %p510 = scmp.eq.s32.totalorder %s50, 0
      %p511 = por %p509, %p510
      %p512 = scmp.le.s32.totalorder 1, %s44
      %p513 = scmp.lt.s32.totalorder %s44, 5
      %p514 = pnand %p512, %p513
      %p515 = pneg %p514
      // Predicated region
      $region9: #{tpu_custom_call.1} parent=5 // pred_check
        _
      $region10: #{tpu_custom_call.1} parent=5 // pred_check_branch
        %517 = sbr.rel (%p514) target = $region12
      $region11: #{tpu_custom_call.1} parent=5 // pred_region
        %s518 = ssub.s32 %s44, 1
        // Predicated region
        $region13: #{tpu_custom_call.1} parent=11 // pred_check
          %p519 = pneg %p103
        $region14: #{tpu_custom_call.1} parent=11 // pred_check_branch
          %521 = sbr.rel (%p519) target = $region16
        $region15: #{tpu_custom_call.1} parent=11 // pred_region
          %s523 = ssub.s32 384, 384
          %524 = vsyncadd [#allocation10], %s523
          %s525 = sshll.u32 [#allocation9], 4
          %s526 = int_to_ptr.vmem [resolvable:$true] %s525
          %531 = dma.hbm_to_vmem [thread:$0]  %s2, 384, %s526, [#allocation10], 64, 64, 4
        $region16: #{tpu_custom_call.1} parent=11 // pred_fallthru
          _
        // Predicated region
        $region17: #{tpu_custom_call.1} parent=11 // pred_check
          %p532 = pneg %p124
        $region18: #{tpu_custom_call.1} parent=11 // pred_check_branch
          %534 = sbr.rel (%p532) target = $region20
        $region19: #{tpu_custom_call.1} parent=11 // pred_region
          %s536 = ssub.s32 16, 16
          %537 = vsyncadd [#allocation10], %s536
          %s539 = sshll.u32 [#allocation11], 4
          %s540 = int_to_ptr.vmem [resolvable:$true] %s539
          %542 = dma.hbm_to_vmem [thread:$0]  %s3, 16, %s540, [#allocation10]
        $region20: #{tpu_custom_call.1} parent=11 // pred_fallthru
          _
        // Predicated region
        $region21: #{tpu_custom_call.1} parent=11 // pred_check
          %p543 = pneg %p457
        $region22: #{tpu_custom_call.1} parent=11 // pred_check_branch
          %545 = sbr.rel (%p543) target = $region24
        $region23: #{tpu_custom_call.1} parent=11 // pred_region
          _
        $region24: #{tpu_custom_call.1} parent=11 // pred_fallthru
          _
        // Predicated region
        $region25: #{tpu_custom_call.1} parent=11 // pred_check
          %p546 = pneg %p478
        $region26: #{tpu_custom_call.1} parent=11 // pred_check_branch
          %548 = sbr.rel (%p546) target = $region28
        $region27: #{tpu_custom_call.1} parent=11 // pred_region
          _
        $region28: #{tpu_custom_call.1} parent=11 // pred_fallthru
          _
      $region12: #{tpu_custom_call.1} parent=5 // pred_fallthru
        _
      %p549 = scmp.lt.s32.totalorder %s44, 4
      // Predicated region
      $region29: #{tpu_custom_call.1} parent=5 // pred_check
        %p550 = pneg %p549
      $region30: #{tpu_custom_call.1} parent=5 // pred_check_branch
        %552 = sbr.rel (%p550) target = $region32
      $region31: #{tpu_custom_call.1} parent=5 // pred_region
        // Predicated region
        $region33: #{tpu_custom_call.1} parent=31 // pred_check
          %p553 = pneg %p76
        $region34: #{tpu_custom_call.1} parent=31 // pred_check_branch
          %555 = sbr.rel (%p553) target = $region36
        $region35: #{tpu_custom_call.1} parent=31 // pred_region
          %s556 = sand.u32 %s66, 1
          %s557 = scalar_lea.sflag [#allocation7], %s556
          %s558 = sand.u32 %s66, 1
          %s559 = smul.addr %s558, 8
          %s560 = scalar_lea.vmem [#allocation6], %s559
          %s562 = ssub.s32 128, 128
          %563 = vsyncadd %s557, %s562
          %s564 = smul.addr %s51, 2
          %s565 = smul.addr %s564, 64
          %s566 = scalar_lea.hbm %s1, %s565
          %s567 = sshll.u32 %s560, 4
          %s568 = int_to_ptr.vmem [resolvable:$true] %s567
          %573 = dma.hbm_to_vmem [thread:$0]  %s566, 128, %s568, %s557, 64, 64, 4
        $region36: #{tpu_custom_call.1} parent=31 // pred_fallthru
          _
        // Predicated region
        $region37: #{tpu_custom_call.1} parent=31 // pred_check
          %p574 = pneg %p144
        $region38: #{tpu_custom_call.1} parent=31 // pred_check_branch
          %576 = sbr.rel (%p574) target = $region40
        $region39: #{tpu_custom_call.1} parent=31 // pred_region
          %s577 = sand.u32 %s44, 1
          %s578 = scalar_lea.sflag [#allocation13], %s577
          %s579 = sand.u32 %s134, 1
          %s580 = smul.addr %s579, 64
          %s581 = scalar_lea.vmem [#allocation12], %s580
          %s583 = ssub.s32 1024, 1024
          %584 = vsyncadd %s578, %s583
          %s585 = smul.addr %s52, 16
          %s586 = smul.addr %s585, 64
          %s587 = scalar_lea.hbm %s4, %s586
          %s588 = sshll.u32 %s581, 4
          %s589 = int_to_ptr.vmem [resolvable:$true] %s588
          %594 = dma.hbm_to_vmem [thread:$0]  %s587, 1024, %s589, %s578, 64, 64, 4
        $region40: #{tpu_custom_call.1} parent=31 // pred_fallthru
          _
        // Predicated region
        $region41: #{tpu_custom_call.1} parent=31 // pred_check
          %p595 = pneg %p170
        $region42: #{tpu_custom_call.1} parent=31 // pred_check_branch
          %597 = sbr.rel (%p595) target = $region44
        $region43: #{tpu_custom_call.1} parent=31 // pred_region
          %p598 = scmp.lt.s32.totalorder %s52, 1
          %s599 = scalar_select %p598, %s52, 1
          %s600 = scalar_lea.vmem %s5, %s599
        $region44: #{tpu_custom_call.1} parent=31 // pred_fallthru
          _
        // Predicated region
        $region45: #{tpu_custom_call.1} parent=31 // pred_check
          %p601 = pneg %p196
        $region46: #{tpu_custom_call.1} parent=31 // pred_check_branch
          %603 = sbr.rel (%p601) target = $region48
        $region47: #{tpu_custom_call.1} parent=31 // pred_region
          %p604 = scmp.lt.s32.totalorder %s52, 1
          %s605 = scalar_select %p604, %s52, 1
          %s606 = scalar_lea.vmem %s6, %s605
        $region48: #{tpu_custom_call.1} parent=31 // pred_fallthru
          _
        // Predicated region
        $region49: #{tpu_custom_call.1} parent=31 // pred_check
          %p607 = pneg %p222
        $region50: #{tpu_custom_call.1} parent=31 // pred_check_branch
          %609 = sbr.rel (%p607) target = $region52
        $region51: #{tpu_custom_call.1} parent=31 // pred_region
          %p610 = scmp.lt.s32.totalorder %s52, 1
          %s611 = scalar_select %p610, %s52, 1
          %s612 = scalar_lea.vmem %s7, %s611
        $region52: #{tpu_custom_call.1} parent=31 // pred_fallthru
          _
        // Predicated region
        $region53: #{tpu_custom_call.1} parent=31 // pred_check
          %p613 = pneg %p248
        $region54: #{tpu_custom_call.1} parent=31 // pred_check_branch
          %615 = sbr.rel (%p613) target = $region56
        $region55: #{tpu_custom_call.1} parent=31 // pred_region
          %p616 = scmp.lt.s32.totalorder %s52, 1
          %s617 = scalar_select %p616, %s52, 1
          %s618 = scalar_lea.vmem %s8, %s617
        $region56: #{tpu_custom_call.1} parent=31 // pred_fallthru
          _
        // Predicated region
        $region57: #{tpu_custom_call.1} parent=31 // pred_check
          %p619 = pneg %p274
        $region58: #{tpu_custom_call.1} parent=31 // pred_check_branch
          %621 = sbr.rel (%p619) target = $region60
        $region59: #{tpu_custom_call.1} parent=31 // pred_region
          %p622 = scmp.lt.s32.totalorder %s52, 1
          %s623 = scalar_select %p622, %s52, 1
          %s624 = smul.addr %s623, 4
          %s625 = scalar_lea.vmem %s9, %s624
        $region60: #{tpu_custom_call.1} parent=31 // pred_fallthru
          _
        // Predicated region
        $region61: #{tpu_custom_call.1} parent=31 // pred_check
          %p626 = pneg %p300
        $region62: #{tpu_custom_call.1} parent=31 // pred_check_branch
          %628 = sbr.rel (%p626) target = $region64
        $region63: #{tpu_custom_call.1} parent=31 // pred_region
          %p629 = scmp.lt.s32.totalorder %s52, 1
          %s630 = scalar_select %p629, %s52, 1
          %s631 = scalar_lea.vmem %s10, %s630
        $region64: #{tpu_custom_call.1} parent=31 // pred_fallthru
          _
        // Predicated region
        $region65: #{tpu_custom_call.1} parent=31 // pred_check
          %p632 = pneg %p326
        $region66: #{tpu_custom_call.1} parent=31 // pred_check_branch
          %634 = sbr.rel (%p632) target = $region68
        $region67: #{tpu_custom_call.1} parent=31 // pred_region
          %s635 = sand.u32 %s44, 1
          %s636 = scalar_lea.sflag [#allocation13], %s635
          %s637 = sand.u32 %s316, 1
          %s638 = scalar_lea.vmem [#allocation14], %s637
          %s640 = ssub.s32 16, 16
          %641 = vsyncadd %s636, %s640
          %s642 = smul.addr %s52, 16
          %s643 = scalar_lea.hbm %s11, %s642
          %s645 = sshll.u32 %s638, 4
          %s646 = int_to_ptr.vmem [resolvable:$true] %s645
          %648 = dma.hbm_to_vmem [thread:$0]  %s643, 16, %s646, %s636
        $region68: #{tpu_custom_call.1} parent=31 // pred_fallthru
          _
        // Predicated region
        $region69: #{tpu_custom_call.1} parent=31 // pred_check
          %p649 = pneg %p352
        $region70: #{tpu_custom_call.1} parent=31 // pred_check_branch
          %651 = sbr.rel (%p649) target = $region72
        $region71: #{tpu_custom_call.1} parent=31 // pred_region
          %s652 = sand.u32 %s44, 1
          %s653 = scalar_lea.sflag [#allocation16], %s652
          %s654 = sand.u32 %s342, 1
          %s655 = scalar_lea.vmem [#allocation15], %s654
          %s657 = ssub.s32 16, 16
          %658 = vsyncadd %s653, %s657
          %s659 = smul.addr %s52, 16
          %s660 = scalar_lea.hbm %s12, %s659
          %s662 = sshll.u32 %s655, 4
          %s663 = int_to_ptr.vmem [resolvable:$true] %s662
          %665 = dma.hbm_to_vmem [thread:$0]  %s660, 16, %s663, %s653
        $region72: #{tpu_custom_call.1} parent=31 // pred_fallthru
          _
        // Predicated region
        $region73: #{tpu_custom_call.1} parent=31 // pred_check
          %p666 = pneg %p378
        $region74: #{tpu_custom_call.1} parent=31 // pred_check_branch
          %668 = sbr.rel (%p666) target = $region76
        $region75: #{tpu_custom_call.1} parent=31 // pred_region
          %s669 = sand.u32 %s44, 1
          %s670 = scalar_lea.sflag [#allocation16], %s669
          %s671 = sand.u32 %s368, 1
          %s672 = scalar_lea.vmem [#allocation17], %s671
          %s674 = ssub.s32 16, 16
          %675 = vsyncadd %s670, %s674
          %s676 = smul.addr %s52, 16
          %s677 = scalar_lea.hbm %s13, %s676
          %s679 = sshll.u32 %s672, 4
          %s680 = int_to_ptr.vmem [resolvable:$true] %s679
          %682 = dma.hbm_to_vmem [thread:$0]  %s677, 16, %s680, %s670
        $region76: #{tpu_custom_call.1} parent=31 // pred_fallthru
          _
        // Predicated region
        $region77: #{tpu_custom_call.1} parent=31 // pred_check
          %p683 = pneg %p404
        $region78: #{tpu_custom_call.1} parent=31 // pred_check_branch
          %685 = sbr.rel (%p683) target = $region80
        $region79: #{tpu_custom_call.1} parent=31 // pred_region
          %s686 = sand.u32 %s44, 1
          %s687 = scalar_lea.sflag [#allocation19], %s686
          %s688 = sand.u32 %s394, 1
          %s689 = smul.addr %s688, 64
          %s690 = scalar_lea.vmem [#allocation18], %s689
          %s692 = ssub.s32 1024, 1024
          %693 = vsyncadd %s687, %s692
          %s694 = smul.addr %s52, 16
          %s695 = smul.addr %s694, 64
          %s696 = scalar_lea.hbm %s14, %s695
          %s697 = sshll.u32 %s690, 4
          %s698 = int_to_ptr.vmem [resolvable:$true] %s697
          %703 = dma.hbm_to_vmem [thread:$0]  %s696, 1024, %s698, %s687, 64, 64, 4
        $region80: #{tpu_custom_call.1} parent=31 // pred_fallthru
          _
        // Predicated region
        $region81: #{tpu_custom_call.1} parent=31 // pred_check
          %p704 = pneg %p430
        $region82: #{tpu_custom_call.1} parent=31 // pred_check_branch
          %706 = sbr.rel (%p704) target = $region84
        $region83: #{tpu_custom_call.1} parent=31 // pred_region
          %s707 = sand.u32 %s44, 1
          %s708 = scalar_lea.sflag [#allocation19], %s707
          %s709 = sand.u32 %s420, 1
          %s710 = scalar_lea.vmem [#allocation20], %s709
          %s712 = ssub.s32 16, 16
          %713 = vsyncadd %s708, %s712
          %s714 = smul.addr %s52, 16
          %s715 = scalar_lea.hbm %s15, %s714
          %s717 = sshll.u32 %s710, 4
          %s718 = int_to_ptr.vmem [resolvable:$true] %s717
          %720 = dma.hbm_to_vmem [thread:$0]  %s715, 16, %s718, %s708
        $region84: #{tpu_custom_call.1} parent=31 // pred_fallthru
          _
      $region32: #{tpu_custom_call.1} parent=5 // pred_fallthru
        _
      %p721 = scmp.le.s32.totalorder 1, %s44
      %p722 = scmp.lt.s32.totalorder %s44, 5
      %p723 = pnand %p721, %p722
      %p724 = pneg %p723
      // Predicated region
      $region85: #{tpu_custom_call.1} parent=5 // pred_check
        _
      $region86: #{tpu_custom_call.1} parent=5 // pred_check_branch
        %726 = sbr.rel (%p723) target = $region88
      $region87: #{tpu_custom_call.1} parent=5 // pred_region
        %s727 = ssub.s32 %s44, 1
        %s728 = sand.u32 %s69, 1
        %s729 = scalar_lea.sflag [#allocation7], %s728
        %s730 = sand.u32 %s69, 1
        %s731 = smul.addr %s730, 8
        %s732 = scalar_lea.vmem [#allocation6], %s731
        // Predicated region
        $region89: #{tpu_custom_call.1} parent=87 // pred_check
          %p733 = pneg %p82
        $region90: #{tpu_custom_call.1} parent=87 // pred_check_branch
          %735 = sbr.rel (%p733) target = $region92
        $region91: #{tpu_custom_call.1} parent=87 // pred_region
          %736 = dma.done %s729, 128
        $region92: #{tpu_custom_call.1} parent=87 // pred_fallthru
          _
        // Predicated region
        $region93: #{tpu_custom_call.1} parent=87 // pred_check
          %p737 = pneg %p103
        $region94: #{tpu_custom_call.1} parent=87 // pred_check_branch
          %739 = sbr.rel (%p737) target = $region96
        $region95: #{tpu_custom_call.1} parent=87 // pred_region
          %740 = dma.done [#allocation10], 384
        $region96: #{tpu_custom_call.1} parent=87 // pred_fallthru
          _
        // Predicated region
        $region97: #{tpu_custom_call.1} parent=87 // pred_check
          %p741 = pneg %p124
        $region98: #{tpu_custom_call.1} parent=87 // pred_check_branch
          %743 = sbr.rel (%p741) target = $region100
        $region99: #{tpu_custom_call.1} parent=87 // pred_region
          %744 = dma.done [#allocation10], 16
        $region100: #{tpu_custom_call.1} parent=87 // pred_fallthru
          _
        %s745 = sand.u32 %s49, 1
        %s746 = scalar_lea.sflag [#allocation13], %s745
        %s747 = sand.u32 %s137, 1
        %s748 = smul.addr %s747, 64
        %s749 = scalar_lea.vmem [#allocation12], %s748
        // Predicated region
        $region101: #{tpu_custom_call.1} parent=87 // pred_check
          %p750 = pneg %p150
        $region102: #{tpu_custom_call.1} parent=87 // pred_check_branch
          %752 = sbr.rel (%p750) target = $region104
        $region103: #{tpu_custom_call.1} parent=87 // pred_region
          %753 = dma.done %s746, 1024
        $region104: #{tpu_custom_call.1} parent=87 // pred_fallthru
          _
        %s754 = sand.u32 %s49, 1
        %s755 = scalar_lea.sflag [#allocation13], %s754
        %s756 = sand.u32 %s319, 1
        %s757 = scalar_lea.vmem [#allocation14], %s756
        // Predicated region
        $region105: #{tpu_custom_call.1} parent=87 // pred_check
          %p758 = pneg %p332
        $region106: #{tpu_custom_call.1} parent=87 // pred_check_branch
          %760 = sbr.rel (%p758) target = $region108
        $region107: #{tpu_custom_call.1} parent=87 // pred_region
          %761 = dma.done %s755, 16
        $region108: #{tpu_custom_call.1} parent=87 // pred_fallthru
          _
        %s762 = sand.u32 %s49, 1
        %s763 = scalar_lea.sflag [#allocation16], %s762
        %s764 = sand.u32 %s345, 1
        %s765 = scalar_lea.vmem [#allocation15], %s764
        // Predicated region
        $region109: #{tpu_custom_call.1} parent=87 // pred_check
          %p766 = pneg %p358
        $region110: #{tpu_custom_call.1} parent=87 // pred_check_branch
          %768 = sbr.rel (%p766) target = $region112
        $region111: #{tpu_custom_call.1} parent=87 // pred_region
          %769 = dma.done %s763, 16
        $region112: #{tpu_custom_call.1} parent=87 // pred_fallthru
          _
        %s770 = sand.u32 %s49, 1
        %s771 = scalar_lea.sflag [#allocation16], %s770
        %s772 = sand.u32 %s371, 1
        %s773 = scalar_lea.vmem [#allocation17], %s772
        // Predicated region
        $region113: #{tpu_custom_call.1} parent=87 // pred_check
          %p774 = pneg %p384
        $region114: #{tpu_custom_call.1} parent=87 // pred_check_branch
          %776 = sbr.rel (%p774) target = $region116
        $region115: #{tpu_custom_call.1} parent=87 // pred_region
          %777 = dma.done %s771, 16
        $region116: #{tpu_custom_call.1} parent=87 // pred_fallthru
          _
        %s778 = sand.u32 %s49, 1
        %s779 = scalar_lea.sflag [#allocation19], %s778
        %s780 = sand.u32 %s397, 1
        %s781 = smul.addr %s780, 64
        %s782 = scalar_lea.vmem [#allocation18], %s781
        // Predicated region
        $region117: #{tpu_custom_call.1} parent=87 // pred_check
          %p783 = pneg %p410
        $region118: #{tpu_custom_call.1} parent=87 // pred_check_branch
          %785 = sbr.rel (%p783) target = $region120
        $region119: #{tpu_custom_call.1} parent=87 // pred_region
          %786 = dma.done %s779, 1024
        $region120: #{tpu_custom_call.1} parent=87 // pred_fallthru
          _
        %s787 = sand.u32 %s49, 1
        %s788 = scalar_lea.sflag [#allocation19], %s787
        %s789 = sand.u32 %s423, 1
        %s790 = scalar_lea.vmem [#allocation20], %s789
        // Predicated region
        $region121: #{tpu_custom_call.1} parent=87 // pred_check
          %p791 = pneg %p436
        $region122: #{tpu_custom_call.1} parent=87 // pred_check_branch
          %793 = sbr.rel (%p791) target = $region124
        $region123: #{tpu_custom_call.1} parent=87 // pred_region
          %794 = dma.done %s788, 16
        $region124: #{tpu_custom_call.1} parent=87 // pred_fallthru
          _
        %s795 = sand.u32 %s69, 1
        %s796 = scalar_lea.sflag [#allocation7], %s795
        %s797 = sand.u32 %s69, 1
        %s798 = smul.addr %s797, 8
        %s799 = scalar_lea.vmem [#allocation6], %s798
        %p800 = pneg %p82
        %p801 = pneg %p79
        %p802 = pneg %p103
        %p803 = pneg %p100
        %p804 = pneg %p124
        %p805 = pneg %p121
        %s806 = sand.u32 %s49, 1
        %s807 = scalar_lea.sflag [#allocation13], %s806
        %s808 = sand.u32 %s137, 1
        %s809 = smul.addr %s808, 64
        %s810 = scalar_lea.vmem [#allocation12], %s809
        %p811 = pneg %p150
        %p812 = pneg %p147
        %p813 = scmp.lt.s32.totalorder %s54, 1
        %s814 = scalar_select %p813, %s54, 1
        %s815 = scalar_lea.vmem %s5, %s814
        %p816 = pneg %p176
        %p817 = pneg %p173
        %p818 = scmp.lt.s32.totalorder %s54, 1
        %s819 = scalar_select %p818, %s54, 1
        %s820 = scalar_lea.vmem %s6, %s819
        %p821 = pneg %p202
        %p822 = pneg %p199
        %p823 = scmp.lt.s32.totalorder %s54, 1
        %s824 = scalar_select %p823, %s54, 1
        %s825 = scalar_lea.vmem %s7, %s824
        %p826 = pneg %p228
        %p827 = pneg %p225
        %p828 = scmp.lt.s32.totalorder %s54, 1
        %s829 = scalar_select %p828, %s54, 1
        %s830 = scalar_lea.vmem %s8, %s829
        %p831 = pneg %p254
        %p832 = pneg %p251
        %p833 = scmp.lt.s32.totalorder %s54, 1
        %s834 = scalar_select %p833, %s54, 1
        %s835 = smul.addr %s834, 4
        %s836 = scalar_lea.vmem %s9, %s835
        %p837 = pneg %p280
        %p838 = pneg %p277
        %p839 = scmp.lt.s32.totalorder %s54, 1
        %s840 = scalar_select %p839, %s54, 1
        %s841 = scalar_lea.vmem %s10, %s840
        %p842 = pneg %p306
        %p843 = pneg %p303
        %s844 = sand.u32 %s49, 1
        %s845 = scalar_lea.sflag [#allocation13], %s844
        %s846 = sand.u32 %s319, 1
        %s847 = scalar_lea.vmem [#allocation14], %s846
        %p848 = pneg %p332
        %p849 = pneg %p329
        %s850 = sand.u32 %s49, 1
        %s851 = scalar_lea.sflag [#allocation16], %s850
        %s852 = sand.u32 %s345, 1
        %s853 = scalar_lea.vmem [#allocation15], %s852
        %p854 = pneg %p358
        %p855 = pneg %p355
        %s856 = sand.u32 %s49, 1
        %s857 = scalar_lea.sflag [#allocation16], %s856
        %s858 = sand.u32 %s371, 1
        %s859 = scalar_lea.vmem [#allocation17], %s858
        %p860 = pneg %p384
        %p861 = pneg %p381
        %s862 = sand.u32 %s49, 1
        %s863 = scalar_lea.sflag [#allocation19], %s862
        %s864 = sand.u32 %s397, 1
        %s865 = smul.addr %s864, 64
        %s866 = scalar_lea.vmem [#allocation18], %s865
        %p867 = pneg %p410
        %p868 = pneg %p407
        %s869 = sand.u32 %s49, 1
        %s870 = scalar_lea.sflag [#allocation19], %s869
        %s871 = sand.u32 %s423, 1
        %s872 = scalar_lea.vmem [#allocation20], %s871
        %p873 = pneg %p436
        %p874 = pneg %p433
        %p875 = pneg %p457
        %p876 = pneg %p454
        %p877 = pneg %p478
        %p878 = pneg %p475
        %p879 = pneg %p504
        %p880 = pneg %p501
        %s881 = sand.u32 %s491, 1
        %s882 = scalar_lea.sflag [#allocation8], %s881
        %s883 = sand.u32 %s491, 1
        %s884 = smul.addr %s883, 8
        %s885 = scalar_lea.vmem [#allocation21], %s884
        %p886 = scmp.lt.s32.totalorder %s54, 1
        %s887 = scalar_select %p886, %s54, 1
        %s888 = scalar_lea.vmem %s5, %s887
        %p889 = scmp.lt.s32.totalorder %s54, 1
        %s890 = scalar_select %p889, %s54, 1
        %s891 = scalar_lea.vmem %s6, %s890
        %p892 = scmp.lt.s32.totalorder %s54, 1
        %s893 = scalar_select %p892, %s54, 1
        %s894 = scalar_lea.vmem %s7, %s893
        %p895 = scmp.lt.s32.totalorder %s54, 1
        %s896 = scalar_select %p895, %s54, 1
        %s897 = scalar_lea.vmem %s8, %s896
        %p898 = scmp.lt.s32.totalorder %s54, 1
        %s899 = scalar_select %p898, %s54, 1
        %s900 = smul.addr %s899, 4
        %s901 = scalar_lea.vmem %s9, %s900
        %p902 = scmp.lt.s32.totalorder %s54, 1
        %s903 = scalar_select %p902, %s54, 1
        %s904 = scalar_lea.vmem %s10, %s903
        %p906 = scmp.eq.s32.totalorder %s54, 0
        // Predicated region
        $region125: #{tpu_custom_call.1} parent=87 // pred_check
          %p907 = pneg %p906
        $region126: #{tpu_custom_call.1} parent=87 // pred_check_branch
          %909 = sbr.rel (%p907) target = $region128
        $region127: #{tpu_custom_call.1} parent=87 // pred_region
          %v910 = vld [vmem:[%s732] sm:$0xf]
          %v911 = vld [vmem:[%s732 + $0x4] sm:$0xf]
          %v912 = vld [vmem:[#allocation9] sm:$0xf]
          %v913 = vld [vmem:[#allocation9 + $0x4] sm:$0xf]
          %v914 = vld [vmem:[#allocation9 + $0x8] sm:$0xf]
          %v915 = vld [vmem:[#allocation9 + $0xc] sm:$0xf]
          %v916 = vld [vmem:[#allocation9 + $0x10] sm:$0xf]
          %v917 = vld [vmem:[#allocation9 + $0x14] sm:$0xf]
          %v918 = vld [vmem:[#allocation11] sm:$0x1]
          %v920 = vlaneseq
          %v921 = vshrl.u32 %v920, 7
          %v922 = vsub.s32 0, %v921
          %v923 = vrot.slane %v918, %v922
          %v927 = vunpack.c.l.b16 %v910
          %v928 = vunpack.c.l.b16 %v911
          %v929 = vpack.c.b16 %v928, %v927
          %v936 = vunpack.c.l.b16 %v912
          %v937 = vunpack.c.l.b16 %v913
          %v938 = vunpack.c.l.b16 %v914
          %v939 = vunpack.c.l.b16 %v915
          %v940 = vunpack.c.l.b16 %v916
          %v941 = vunpack.c.l.b16 %v917
          %v942 = vpack.c.b16 %v937, %v936
          %v943 = vpack.c.b16 %v939, %v938
          %v944 = vpack.c.b16 %v941, %v940
          %vm948 = vcmask 392192
          %v950 = vsel %vm948, %v929, 0
          %952 = vmatprep.subr.bf16.mxu0 0
          %953 = vmatpush1.bf16.msra.mxu0 %v942
          %954 = vmatprep.subr.bf16.mxu0 0
          %955 = vmatpush1.bf16.msra.mxu0 %v943
          %956 = vmatprep.subr.bf16.mxu0 0
          %957 = vmatpush1.bf16.msra.mxu0 %v944
          %958 = vmatprep.subr.bf16.mxu0 0
          %959 = vmatpush1.bf16.msra.mxu0 0
          %960 = vmatprep.subr.bf16.mxu0 0
          %961 = vmatpush1.bf16.msra.mxu0 0
          %962 = vmatprep.subr.bf16.mxu0 0
          %963 = vmatpush1.bf16.msra.mxu0 0
          %964 = vmatprep.subr.bf16.mxu0 0
          %965 = vmatpush1.bf16.msra.mxu0 0
          %966 = vmatprep.subr.bf16.mxu0 0
          %967 = vmatpush1.bf16.msra.mxu0 0
          %968 = vmatprep.subr.bf16.mxu0 0
          %969 = vmatpush1.bf16.msra.mxu0 0
          %970 = vmatprep.subr.bf16.mxu0 0
          %971 = vmatpush1.bf16.msra.mxu0 0
          %972 = vmatprep.subr.bf16.mxu0 0
          %973 = vmatpush1.bf16.msra.mxu0 0
          %974 = vmatprep.subr.bf16.mxu0 0
          %975 = vmatpush1.bf16.msra.mxu0 0
          %976 = vmatprep.subr.bf16.mxu0 0
          %977 = vmatpush1.bf16.msra.mxu0 0
          %978 = vmatprep.subr.bf16.mxu0 0
          %979 = vmatpush1.bf16.msra.mxu0 0
          %980 = vmatprep.subr.bf16.mxu0 0
          %981 = vmatpush1.bf16.msra.mxu0 0
          %982 = vmatprep.subr.bf16.mxu0 0
          %983 = vmatpush1.bf16.msra.mxu0 0
          %984 = vmatprep.mubr.bf16.mxu0 0
          %985 = vmatmul.mubr.bf16.gmra.mrb[0].mxu0 %v950
          %v986 = vpop.f32.mrb[0].mxu0
          %v987 = vadd.f32 %v923, %v986
          %v988 = vpop.f32.mrb[0].mxu0
          %v989 = vpop.f32.mrb[0].mxu0
          %v990 = vadd.f32 %v923, %v989
          %v991 = vpop.f32.mrb[0].mxu0
          %992 = vdwg.mxu0
          %993 = vst [vmem:[#allocation2] sm:$0xff] %v987
          %994 = vst [vmem:[#allocation2 + $0x8] sm:$0xff] %v990
        $region128: #{tpu_custom_call.1} parent=87 // pred_fallthru
          _
        %v995 = vld [vmem:[#allocation2] sm:$0xff]
        %v996 = vld [vmem:[#allocation2 + $0x8] sm:$0xff]
        %v997 = vpack.c.bf16 %v996, %v995
        %v998 = vld [vmem:[%s749] sm:$0xf]
        %v999 = vld [vmem:[%s749 + $0x4] sm:$0xf]
        %v1000 = vld [vmem:[%s749 + $0x8] sm:$0xf]
        %v1001 = vld [vmem:[%s749 + $0xc] sm:$0xf]
        %v1002 = vld [vmem:[%s749 + $0x10] sm:$0xf]
        %v1003 = vld [vmem:[%s749 + $0x14] sm:$0xf]
        %v1004 = vld [vmem:[%s749 + $0x18] sm:$0xf]
        %v1005 = vld [vmem:[%s749 + $0x1c] sm:$0xf]
        %v1006 = vld [vmem:[%s749 + $0x20] sm:$0xf]
        %v1007 = vld [vmem:[%s749 + $0x24] sm:$0xf]
        %v1008 = vld [vmem:[%s749 + $0x28] sm:$0xf]
        %v1009 = vld [vmem:[%s749 + $0x2c] sm:$0xf]
        %v1010 = vld [vmem:[%s749 + $0x30] sm:$0xf]
        %v1011 = vld [vmem:[%s749 + $0x34] sm:$0xf]
        %v1012 = vld [vmem:[%s749 + $0x38] sm:$0xf]
        %v1013 = vld [vmem:[%s749 + $0x3c] sm:$0xf]
        %v1014 = vld [vmem:[%s888] sm:$0x1]
        %v1016 = vlaneseq
        %v1017 = vshrl.u32 %v1016, 7
        %v1018 = vsub.s32 0, %v1017
        %v1019 = vrot.slane %v1014, %v1018
        %v1037 = vunpack.c.l.b16 %v998
        %v1038 = vunpack.c.l.b16 %v999
        %v1039 = vunpack.c.l.b16 %v1000
        %v1040 = vunpack.c.l.b16 %v1001
        %v1041 = vunpack.c.l.b16 %v1002
        %v1042 = vunpack.c.l.b16 %v1003
        %v1043 = vunpack.c.l.b16 %v1004
        %v1044 = vunpack.c.l.b16 %v1005
        %v1045 = vunpack.c.l.b16 %v1006
        %v1046 = vunpack.c.l.b16 %v1007
        %v1047 = vunpack.c.l.b16 %v1008
        %v1048 = vunpack.c.l.b16 %v1009
        %v1049 = vunpack.c.l.b16 %v1010
        %v1050 = vunpack.c.l.b16 %v1011
        %v1051 = vunpack.c.l.b16 %v1012
        %v1052 = vunpack.c.l.b16 %v1013
        %v1053 = vpack.c.b16 %v1038, %v1037
        %v1054 = vpack.c.b16 %v1040, %v1039
        %v1055 = vpack.c.b16 %v1042, %v1041
        %v1056 = vpack.c.b16 %v1044, %v1043
        %v1057 = vpack.c.b16 %v1046, %v1045
        %v1058 = vpack.c.b16 %v1048, %v1047
        %v1059 = vpack.c.b16 %v1050, %v1049
        %v1060 = vpack.c.b16 %v1052, %v1051
        %1069 = vmatprep.subr.bf16.mxu0 0
        %1070 = vmatpush1.bf16.msra.mxu0 %v1053
        %1071 = vmatprep.subr.bf16.mxu0 0
        %1072 = vmatpush1.bf16.msra.mxu0 %v1054
        %1073 = vmatprep.subr.bf16.mxu0 0
        %1074 = vmatpush1.bf16.msra.mxu0 %v1055
        %1075 = vmatprep.subr.bf16.mxu0 0
        %1076 = vmatpush1.bf16.msra.mxu0 %v1056
        %1077 = vmatprep.subr.bf16.mxu0 0
        %1078 = vmatpush1.bf16.msra.mxu0 %v1057
        %1079 = vmatprep.subr.bf16.mxu0 0
        %1080 = vmatpush1.bf16.msra.mxu0 %v1058
        %1081 = vmatprep.subr.bf16.mxu0 0
        %1082 = vmatpush1.bf16.msra.mxu0 %v1059
        %1083 = vmatprep.subr.bf16.mxu0 0
        %1084 = vmatpush1.bf16.msra.mxu0 %v1060
        %1085 = vmatprep.subr.bf16.mxu0 0
        %1086 = vmatpush1.bf16.msra.mxu0 0
        %1087 = vmatprep.subr.bf16.mxu0 0
        %1088 = vmatpush1.bf16.msra.mxu0 0
        %1089 = vmatprep.subr.bf16.mxu0 0
        %1090 = vmatpush1.bf16.msra.mxu0 0
        %1091 = vmatprep.subr.bf16.mxu0 0
        %1092 = vmatpush1.bf16.msra.mxu0 0
        %1093 = vmatprep.subr.bf16.mxu0 0
        %1094 = vmatpush1.bf16.msra.mxu0 0
        %1095 = vmatprep.subr.bf16.mxu0 0
        %1096 = vmatpush1.bf16.msra.mxu0 0
        %1097 = vmatprep.subr.bf16.mxu0 0
        %1098 = vmatpush1.bf16.msra.mxu0 0
        %1099 = vmatprep.subr.bf16.mxu0 0
        %1100 = vmatpush1.bf16.msra.mxu0 0
        %1101 = vmatprep.mubr.bf16.mxu0 0
        %1102 = vmatmul.mubr.bf16.gmra.mrb[0].mxu0 %v997
        %v1103 = vpop.f32.mrb[0].mxu0
        %v1104 = vadd.f32 %v1019, %v1103
        %v1105 = vpop.f32.mrb[0].mxu0
        %v1106 = vpop.f32.mrb[0].mxu0
        %v1107 = vadd.f32 %v1019, %v1106
        %v1108 = vpop.f32.mrb[0].mxu0
        %1109 = vdwg.mxu0
        %v1110 = vld [vmem:[%s891] sm:$0x1]
        %vm1111 = vcmp.ge.f32.partialorder %v1104, 0.0
        %vm1112 = vcmp.ge.f32.partialorder %v1107, 0.0
        %v1114 = vlaneseq
        %v1115 = vshrl.u32 %v1114, 7
        %v1116 = vsub.s32 0, %v1115
        %v1117 = vrot.slane %v1110, %v1116
        %v1119 = vmul.f32 %v1117, %v1104
        %v1120 = vmul.f32 %v1117, %v1107
        %v1121 = vsel %vm1111, %v1104, %v1119
        %v1122 = vsel %vm1112, %v1107, %v1120
        %v1123 = vadd.f32 %v1121, %v1122
        %v1124 = vrot.slane %v1123, 4
        %v1125 = vadd.f32 %v1123, %v1124
        %v1126 = vrot.slane %v1125, 2
        %v1127 = vadd.f32 %v1125, %v1126
        %v1128 = vrot.slane %v1127, 1
        %v1129 = vadd.f32 %v1127, %v1128
        %v1130 = vrcp.pop 16.0
        %v1131 = vmul.f32 %v1129, %v1130
        %v1132 = vsub.f32 %v1121, %v1131
        %v1133 = vsub.f32 %v1122, %v1131
        %v1134 = vmul.f32 %v1132, %v1132
        %v1135 = vmul.f32 %v1133, %v1133
        %v1136 = vadd.f32 %v1134, %v1135
        %v1137 = vrot.slane %v1136, 4
        %v1138 = vadd.f32 %v1136, %v1137
        %v1139 = vrot.slane %v1138, 2
        %v1140 = vadd.f32 %v1138, %v1139
        %v1141 = vrot.slane %v1140, 1
        %v1142 = vadd.f32 %v1140, %v1141
        %v1143 = vmul.f32 %v1142, %v1130
        %v1144 = vld [vmem:[%s894] sm:$0x1]
        %v1145 = vld [vmem:[%s897] sm:$0x1]
        %v1146 = vadd.f32 %v1143, 1e-05
        %v1147 = vrsqrt.pop %v1146
        %v1148 = vmul.f32 %v1144, %v1147
        %1149 = vst [vmem:[#allocation3 + $0x8] sm:$0xff] %v1132
        %1150 = vst [vmem:[#allocation3 + $0x10] sm:$0xff] %v1133
        %vm1151 = vcmp.eq.f32.partialorder %v1148, 0.0
        %v1152 = vsel %vm1151, 1.0, %v1148
        %v1153 = vsub.f32 0.0, %v1145
        %v1154 = vrcp.pop %v1152
        %v1155 = vmul.f32 %v1153, %v1154
        %v1157 = vlaneseq
        %v1158 = vshrl.u32 %v1157, 7
        %v1159 = vsub.s32 0, %v1158
        %v1160 = vrot.slane %v1155, %v1159
        %1162 = vst [vmem:[#allocation3] sm:$0xff] %v1160
        %1163 = vst [vmem:[#allocation3 + $0x18] sm:$0x3] %v1160
        %s1164 = sld [smem:[#allocation5 + %s54]]
        %v1165 = vld [vmem:[%s901] sm:$0x7]
        %s1166 = ssub.s32 8, %s1164
        %s1167 = scalar_lea.vmem [#allocation3], %s1166
        %v1168 = vld [vmem:[%s1167] sm:$0xff]
        %v1169 = vld [vmem:[%s1167 + $0x8] sm:$0xff]
        %v1170 = vmul.f32 %v1165, %v1148
        %v1171 = vlaneseq
        %v1172 = vshrl.u32 %v1171, 7
        %v1173 = vsub.s32 0, %v1172
        %v1174 = vrot.slane %v1170, %v1173
        %v1175 = vmul.f32 %v1168, %v1174
        %v1176 = vmul.f32 %v1169, %v1174
        %v1177 = vld [vmem:[#allocation3 + $0x8] sm:$0xff]
        %v1178 = vld [vmem:[#allocation3 + $0x10] sm:$0xff]
        %v1180 = vlaneseq
        %v1181 = vshrl.u32 %v1180, 7
        %v1182 = vsub.s32 0, %v1181
        %v1183 = vrot.slane %v1148, %v1182
        %v1185 = vmul.f32 %v1165, %v1183
        %v1186 = vlaneseq
        %v1187 = vshrl.u32 %v1186, 7
        %v1188 = vsub.s32 1, %v1187
        %v1189 = vrot.slane %v1185, %v1188
        %v1190 = vmul.f32 %v1177, %v1189
        %v1191 = vmul.f32 %v1178, %v1189
        %v1192 = vadd.f32 %v1175, %v1190
        %v1193 = vadd.f32 %v1176, %v1191
        %v1195 = vrot.slane %v1165, 1
        %v1197 = vadd.f32 %v1165, %v1195
        %s1198 = sadd.s32 %s1164, 8
        %s1199 = scalar_lea.vmem [#allocation3], %s1198
        %v1200 = vld [vmem:[%s1199] sm:$0xff]
        %v1201 = vld [vmem:[%s1199 + $0x8] sm:$0xff]
        %v1202 = vlaneseq
        %v1203 = vshrl.u32 %v1202, 7
        %v1204 = vsub.s32 2, %v1203
        %v1205 = vrot.slane %v1185, %v1204
        %v1206 = vmul.f32 %v1200, %v1205
        %v1207 = vmul.f32 %v1201, %v1205
        %v1208 = vadd.f32 %v1192, %v1206
        %v1209 = vadd.f32 %v1193, %v1207
        %v1210 = vrot.slane %v1165, 2
        %v1212 = vadd.f32 %v1197, %v1210
        %v1213 = vmul.f32 %v1145, %v1212
        %v1214 = vld [vmem:[%s904] sm:$0x1]
        %v1215 = vadd.f32 %v1213, %v1214
        %v1217 = vlaneseq
        %v1218 = vshrl.u32 %v1217, 7
        %v1219 = vsub.s32 0, %v1218
        %v1220 = vrot.slane %v1215, %v1219
        %v1222 = vadd.f32 %v1208, %v1220
        %v1223 = vadd.f32 %v1209, %v1220
        %v1224 = vld [vmem:[%s757] sm:$0x1]
        %vm1225 = vcmp.ge.f32.partialorder %v1222, 0.0
        %vm1226 = vcmp.ge.f32.partialorder %v1223, 0.0
        %v1228 = vlaneseq
        %v1229 = vshrl.u32 %v1228, 7
        %v1230 = vsub.s32 0, %v1229
        %v1231 = vrot.slane %v1224, %v1230
        %v1233 = vmul.f32 %v1231, %v1222
        %v1234 = vmul.f32 %v1231, %v1223
        %v1235 = vsel %vm1225, %v1222, %v1233
        %v1236 = vsel %vm1226, %v1223, %v1234
        %v1237 = vadd.f32 %v1235, %v1236
        %v1238 = vrot.slane %v1237, 4
        %v1239 = vadd.f32 %v1237, %v1238
        %v1240 = vrot.slane %v1239, 2
        %v1241 = vadd.f32 %v1239, %v1240
        %v1242 = vrot.slane %v1241, 1
        %v1243 = vadd.f32 %v1241, %v1242
        %v1244 = vmul.f32 %v1243, %v1130
        %v1245 = vsub.f32 %v1235, %v1244
        %v1246 = vsub.f32 %v1236, %v1244
        %v1247 = vmul.f32 %v1245, %v1245
        %v1248 = vmul.f32 %v1246, %v1246
        %v1249 = vadd.f32 %v1247, %v1248
        %v1250 = vrot.slane %v1249, 4
        %v1251 = vadd.f32 %v1249, %v1250
        %v1252 = vrot.slane %v1251, 2
        %v1253 = vadd.f32 %v1251, %v1252
        %v1254 = vrot.slane %v1253, 1
        %v1255 = vadd.f32 %v1253, %v1254
        %v1256 = vmul.f32 %v1255, %v1130
        %v1257 = vld [vmem:[%s765] sm:$0x1]
        %v1258 = vadd.f32 %v1256, 1e-05
        %v1259 = vrsqrt.pop %v1258
        %v1260 = vmul.f32 %v1257, %v1259
        %v1262 = vlaneseq
        %v1263 = vshrl.u32 %v1262, 7
        %v1264 = vsub.s32 0, %v1263
        %v1265 = vrot.slane %v1260, %v1264
        %v1267 = vmul.f32 %v1245, %v1265
        %v1268 = vmul.f32 %v1246, %v1265
        %v1269 = vld [vmem:[%s773] sm:$0x1]
        %v1271 = vlaneseq
        %v1272 = vshrl.u32 %v1271, 7
        %v1273 = vsub.s32 0, %v1272
        %v1274 = vrot.slane %v1269, %v1273
        %v1276 = vadd.f32 %v1267, %v1274
        %v1277 = vadd.f32 %v1268, %v1274
        %v1278 = vpack.c.bf16 %v1277, %v1276
        %v1279 = vld [vmem:[%s782] sm:$0xf]
        %v1280 = vld [vmem:[%s782 + $0x4] sm:$0xf]
        %v1281 = vld [vmem:[%s782 + $0x8] sm:$0xf]
        %v1282 = vld [vmem:[%s782 + $0xc] sm:$0xf]
        %v1283 = vld [vmem:[%s782 + $0x10] sm:$0xf]
        %v1284 = vld [vmem:[%s782 + $0x14] sm:$0xf]
        %v1285 = vld [vmem:[%s782 + $0x18] sm:$0xf]
        %v1286 = vld [vmem:[%s782 + $0x1c] sm:$0xf]
        %v1287 = vld [vmem:[%s782 + $0x20] sm:$0xf]
        %v1288 = vld [vmem:[%s782 + $0x24] sm:$0xf]
        %v1289 = vld [vmem:[%s782 + $0x28] sm:$0xf]
        %v1290 = vld [vmem:[%s782 + $0x2c] sm:$0xf]
        %v1291 = vld [vmem:[%s782 + $0x30] sm:$0xf]
        %v1292 = vld [vmem:[%s782 + $0x34] sm:$0xf]
        %v1293 = vld [vmem:[%s782 + $0x38] sm:$0xf]
        %v1294 = vld [vmem:[%s782 + $0x3c] sm:$0xf]
        %v1311 = vunpack.c.l.b16 %v1279
        %v1312 = vunpack.c.l.b16 %v1280
        %v1313 = vunpack.c.l.b16 %v1281
        %v1314 = vunpack.c.l.b16 %v1282
        %v1315 = vunpack.c.l.b16 %v1283
        %v1316 = vunpack.c.l.b16 %v1284
        %v1317 = vunpack.c.l.b16 %v1285
        %v1318 = vunpack.c.l.b16 %v1286
        %v1319 = vunpack.c.l.b16 %v1287
        %v1320 = vunpack.c.l.b16 %v1288
        %v1321 = vunpack.c.l.b16 %v1289
        %v1322 = vunpack.c.l.b16 %v1290
        %v1323 = vunpack.c.l.b16 %v1291
        %v1324 = vunpack.c.l.b16 %v1292
        %v1325 = vunpack.c.l.b16 %v1293
        %v1326 = vunpack.c.l.b16 %v1294
        %v1327 = vpack.c.b16 %v1312, %v1311
        %v1328 = vpack.c.b16 %v1314, %v1313
        %v1329 = vpack.c.b16 %v1316, %v1315
        %v1330 = vpack.c.b16 %v1318, %v1317
        %v1331 = vpack.c.b16 %v1320, %v1319
        %v1332 = vpack.c.b16 %v1322, %v1321
        %v1333 = vpack.c.b16 %v1324, %v1323
        %v1334 = vpack.c.b16 %v1326, %v1325
        %1343 = vmatprep.subr.bf16.mxu0 0
        %1344 = vmatpush1.bf16.msra.mxu0 %v1327
        %1345 = vmatprep.subr.bf16.mxu0 0
        %1346 = vmatpush1.bf16.msra.mxu0 %v1328
        %1347 = vmatprep.subr.bf16.mxu0 0
        %1348 = vmatpush1.bf16.msra.mxu0 %v1329
        %1349 = vmatprep.subr.bf16.mxu0 0
        %1350 = vmatpush1.bf16.msra.mxu0 %v1330
        %1351 = vmatprep.subr.bf16.mxu0 0
        %1352 = vmatpush1.bf16.msra.mxu0 %v1331
        %1353 = vmatprep.subr.bf16.mxu0 0
        %1354 = vmatpush1.bf16.msra.mxu0 %v1332
        %1355 = vmatprep.subr.bf16.mxu0 0
        %1356 = vmatpush1.bf16.msra.mxu0 %v1333
        %1357 = vmatprep.subr.bf16.mxu0 0
        %1358 = vmatpush1.bf16.msra.mxu0 %v1334
        %1359 = vmatprep.subr.bf16.mxu0 0
        %1360 = vmatpush1.bf16.msra.mxu0 0
        %1361 = vmatprep.subr.bf16.mxu0 0
        %1362 = vmatpush1.bf16.msra.mxu0 0
        %1363 = vmatprep.subr.bf16.mxu0 0
        %1364 = vmatpush1.bf16.msra.mxu0 0
        %1365 = vmatprep.subr.bf16.mxu0 0
        %1366 = vmatpush1.bf16.msra.mxu0 0
        %1367 = vmatprep.subr.bf16.mxu0 0
        %1368 = vmatpush1.bf16.msra.mxu0 0
        %1369 = vmatprep.subr.bf16.mxu0 0
        %1370 = vmatpush1.bf16.msra.mxu0 0
        %1371 = vmatprep.subr.bf16.mxu0 0
        %1372 = vmatpush1.bf16.msra.mxu0 0
        %1373 = vmatprep.subr.bf16.mxu0 0
        %1374 = vmatpush1.bf16.msra.mxu0 0
        %1375 = vmatprep.mubr.bf16.mxu0 0
        %1376 = vmatmul.mubr.bf16.gmra.mrb[0].mxu0 %v1278
        %v1377 = vpop.f32.mrb[0].mxu0
        %v1378 = vadd.f32 0.0, %v1377
        %v1379 = vpop.f32.mrb[0].mxu0
        %v1380 = vpop.f32.mrb[0].mxu0
        %v1381 = vadd.f32 0.0, %v1380
        %v1382 = vpop.f32.mrb[0].mxu0
        %1383 = vdwg.mxu0
        %v1384 = vadd.f32 %v995, %v1378
        %v1385 = vadd.f32 %v996, %v1381
        %v1386 = vld [vmem:[%s790] sm:$0x1]
        %v1388 = vlaneseq
        %v1389 = vshrl.u32 %v1388, 7
        %v1390 = vsub.s32 0, %v1389
        %v1391 = vrot.slane %v1386, %v1390
        %v1393 = vadd.f32 %v1384, %v1391
        %v1394 = vadd.f32 %v1385, %v1391
        %1395 = vst [vmem:[#allocation2] sm:$0xff] %v1393
        %1396 = vst [vmem:[#allocation2 + $0x8] sm:$0xff] %v1394
        %p1397 = scmp.eq.s32.totalorder %s54, 1
        // Predicated region
        $region129: #{tpu_custom_call.1} parent=87 // pred_check
          %p1398 = pneg %p1397
        $region130: #{tpu_custom_call.1} parent=87 // pred_check_branch
          %1400 = sbr.rel (%p1398) target = $region132
        $region131: #{tpu_custom_call.1} parent=87 // pred_region
          %v1401 = vpack.c.bf16 %v1394, %v1393
          %v1402 = vld [vmem:[%s16] sm:$0xf]
          %v1403 = vld [vmem:[%s16 + $0x4] sm:$0xf]
          %v1404 = vld [vmem:[%s16 + $0x8] sm:$0xf]
          %v1405 = vld [vmem:[%s16 + $0xc] sm:$0xf]
          %v1406 = vld [vmem:[%s16 + $0x10] sm:$0xf]
          %v1407 = vld [vmem:[%s16 + $0x14] sm:$0xf]
          %v1408 = vld [vmem:[%s16 + $0x18] sm:$0xf]
          %v1409 = vld [vmem:[%s16 + $0x1c] sm:$0xf]
          %v1410 = vld [vmem:[%s16 + $0x20] sm:$0xf]
          %v1411 = vld [vmem:[%s16 + $0x24] sm:$0xf]
          %v1412 = vld [vmem:[%s16 + $0x28] sm:$0xf]
          %v1413 = vld [vmem:[%s16 + $0x2c] sm:$0xf]
          %v1414 = vld [vmem:[%s16 + $0x30] sm:$0xf]
          %v1415 = vld [vmem:[%s16 + $0x34] sm:$0xf]
          %v1416 = vld [vmem:[%s16 + $0x38] sm:$0xf]
          %v1417 = vld [vmem:[%s16 + $0x3c] sm:$0xf]
          %v1418 = vld [vmem:[%s17] sm:$0x1]
          %v1420 = vlaneseq
          %v1421 = vshrl.u32 %v1420, 7
          %v1422 = vsub.s32 0, %v1421
          %v1423 = vrot.slane %v1418, %v1422
          %v1441 = vunpack.c.l.b16 %v1402
          %v1442 = vunpack.c.l.b16 %v1403
          %v1443 = vunpack.c.l.b16 %v1404
          %v1444 = vunpack.c.l.b16 %v1405
          %v1445 = vunpack.c.l.b16 %v1406
          %v1446 = vunpack.c.l.b16 %v1407
          %v1447 = vunpack.c.l.b16 %v1408
          %v1448 = vunpack.c.l.b16 %v1409
          %v1449 = vunpack.c.l.b16 %v1410
          %v1450 = vunpack.c.l.b16 %v1411
          %v1451 = vunpack.c.l.b16 %v1412
          %v1452 = vunpack.c.l.b16 %v1413
          %v1453 = vunpack.c.l.b16 %v1414
          %v1454 = vunpack.c.l.b16 %v1415
          %v1455 = vunpack.c.l.b16 %v1416
          %v1456 = vunpack.c.l.b16 %v1417
          %v1457 = vpack.c.b16 %v1442, %v1441
          %v1458 = vpack.c.b16 %v1444, %v1443
          %v1459 = vpack.c.b16 %v1446, %v1445
          %v1460 = vpack.c.b16 %v1448, %v1447
          %v1461 = vpack.c.b16 %v1450, %v1449
          %v1462 = vpack.c.b16 %v1452, %v1451
          %v1463 = vpack.c.b16 %v1454, %v1453
          %v1464 = vpack.c.b16 %v1456, %v1455
          %1473 = vmatprep.subr.bf16.mxu0 0
          %1474 = vmatpush1.bf16.msra.mxu0 %v1457
          %1475 = vmatprep.subr.bf16.mxu0 0
          %1476 = vmatpush1.bf16.msra.mxu0 %v1458
          %1477 = vmatprep.subr.bf16.mxu0 0
          %1478 = vmatpush1.bf16.msra.mxu0 %v1459
          %1479 = vmatprep.subr.bf16.mxu0 0
          %1480 = vmatpush1.bf16.msra.mxu0 %v1460
          %1481 = vmatprep.subr.bf16.mxu0 0
          %1482 = vmatpush1.bf16.msra.mxu0 %v1461
          %1483 = vmatprep.subr.bf16.mxu0 0
          %1484 = vmatpush1.bf16.msra.mxu0 %v1462
          %1485 = vmatprep.subr.bf16.mxu0 0
          %1486 = vmatpush1.bf16.msra.mxu0 %v1463
          %1487 = vmatprep.subr.bf16.mxu0 0
          %1488 = vmatpush1.bf16.msra.mxu0 %v1464
          %1489 = vmatprep.subr.bf16.mxu0 0
          %1490 = vmatpush1.bf16.msra.mxu0 0
          %1491 = vmatprep.subr.bf16.mxu0 0
          %1492 = vmatpush1.bf16.msra.mxu0 0
          %1493 = vmatprep.subr.bf16.mxu0 0
          %1494 = vmatpush1.bf16.msra.mxu0 0
          %1495 = vmatprep.subr.bf16.mxu0 0
          %1496 = vmatpush1.bf16.msra.mxu0 0
          %1497 = vmatprep.subr.bf16.mxu0 0
          %1498 = vmatpush1.bf16.msra.mxu0 0
          %1499 = vmatprep.subr.bf16.mxu0 0
          %1500 = vmatpush1.bf16.msra.mxu0 0
          %1501 = vmatprep.subr.bf16.mxu0 0
          %1502 = vmatpush1.bf16.msra.mxu0 0
          %1503 = vmatprep.subr.bf16.mxu0 0
          %1504 = vmatpush1.bf16.msra.mxu0 0
          %1505 = vmatprep.mubr.bf16.mxu0 0
          %1506 = vmatmul.mubr.bf16.gmra.mrb[0].mxu0 %v1401
          %v1507 = vpop.f32.mrb[0].mxu0
          %v1508 = vadd.f32 %v1423, %v1507
          %v1509 = vpop.f32.mrb[0].mxu0
          %v1510 = vpop.f32.mrb[0].mxu0
          %v1511 = vadd.f32 %v1423, %v1510
          %v1512 = vpop.f32.mrb[0].mxu0
          %1513 = vdwg.mxu0
          %v1514 = vpack.c.bf16 %v1511, %v1508
          %v1516 = vunpack.c.l.b16 %v1514
          %v1517 = vunpack.c.h.b16 %v1514
          %v1518 = vpack.c.b16 %v1516, %v1516
          %v1519 = vpack.c.b16 %v1517, %v1517
          %1522 = vst [vmem:[%s885] sm:$0xf] %v1518
          %1523 = vst [vmem:[%s885 + $0x4] sm:$0xf] %v1519
        $region132: #{tpu_custom_call.1} parent=87 // pred_fallthru
          _
        %s1524 = sand.u32 %s491, 1
        %s1525 = scalar_lea.sflag [#allocation8], %s1524
        %s1526 = sand.u32 %s491, 1
        %s1527 = smul.addr %s1526, 8
        %s1528 = scalar_lea.vmem [#allocation21], %s1527
        // Predicated region
        $region133: #{tpu_custom_call.1} parent=87 // pred_check
          %p1529 = pneg %p501
        $region134: #{tpu_custom_call.1} parent=87 // pred_check_branch
          %1531 = sbr.rel (%p1529) target = $region136
        $region135: #{tpu_custom_call.1} parent=87 // pred_region
          %s1533 = ssub.s32 128, 128
          %1534 = vsyncadd %s1525, %s1533
          %s1535 = smul.addr %s53, 2
          %s1536 = smul.addr %s1535, 64
          %s1537 = scalar_lea.hbm %s18, %s1536
          %s1538 = sshll.u32 %s1528, 4
          %s1539 = int_to_ptr.vmem [resolvable:$true] %s1538
          %1544 = dma.vmem_to_hbm [thread:$0]  %s1539, 128, %s1537, %s1525, 64, 64, 4
        $region136: #{tpu_custom_call.1} parent=87 // pred_fallthru
          _
      $region88: #{tpu_custom_call.1} parent=5 // pred_fallthru
        _
      %p1545 = scmp.le.s32.totalorder 2, %s44
      // Predicated region
      $region137: #{tpu_custom_call.1} parent=5 // pred_check
        %p1546 = pneg %p1545
      $region138: #{tpu_custom_call.1} parent=5 // pred_check_branch
        %1548 = sbr.rel (%p1546) target = $region140
      $region139: #{tpu_custom_call.1} parent=5 // pred_region
        %s1549 = ssub.s32 %s44, 2
        // Predicated region
        $region141: #{tpu_custom_call.1} parent=139 // pred_check
          %p1550 = pneg %p507
        $region142: #{tpu_custom_call.1} parent=139 // pred_check_branch
          %1552 = sbr.rel (%p1550) target = $region144
        $region143: #{tpu_custom_call.1} parent=139 // pred_region
          %s1553 = sand.u32 %s492, 1
          %s1554 = scalar_lea.sflag [#allocation8], %s1553
          %s1555 = sand.u32 %s492, 1
          %s1556 = smul.addr %s1555, 8
          %s1557 = scalar_lea.vmem [#allocation21], %s1556
          %1558 = dma.done %s1554, 128
        $region144: #{tpu_custom_call.1} parent=139 // pred_fallthru
          _
      $region140: #{tpu_custom_call.1} parent=5 // pred_fallthru
        _
    $region6: #{tpu_custom_call.1} parent=1 // loop_footer
      %s48 = sadd.s32 1, %s44
    $region7: #{tpu_custom_call.1} parent=1 // loop_footer_branch
      %43 = sbr.rel target = $region3
    $region8: #{tpu_custom_call.1} parent=1 // loop_exit
      _
    %1559 = vsyncpa [#allocation7], 1
    %s1560 = scalar_lea.sflag [#allocation7], 1
    %1561 = vsyncpa %s1560, 1
    %1562 = vsyncpa [#allocation10], 1
    %1563 = vsyncpa [#allocation13], 1
    %s1564 = scalar_lea.sflag [#allocation13], 1
    %1565 = vsyncpa %s1564, 1
    %1566 = vsyncpa [#allocation16], 1
    %s1567 = scalar_lea.sflag [#allocation16], 1
    %1568 = vsyncpa %s1567, 1
    %1569 = vsyncpa [#allocation19], 1
    %s1570 = scalar_lea.sflag [#allocation19], 1
    %1571 = vsyncpa %s1570, 1
    %1572 = vsyncpa [#allocation8], 1
    %s1573 = scalar_lea.sflag [#allocation8], 1
    %1574 = vsyncpa %s1573, 1

</llo_original>
